<compile_context>
chip_gen: v7x
topology: tpu7x:2x2x1
jax: 0.10.0
libtpu: 0.0.40
codegen_flags: <defaults>
</compile_context>

<pallas_src>
import functools

import jax
import jax.numpy as jnp
from jax.experimental import pallas as pl
from jax.experimental.pallas import tpu as pltpu

DIMS = [5, 20, 20, 20, 20, 20, 1]  # layer widths from Actor.__init__
LANE = 128                         # TPU lane width


def _round_up(n, m):
    return ((n + m - 1) // m) * m


def actor_kernel(dot_precision, x_ref, w_in, b_in, w_hid, b_hid, w_out, b_out, o_ref):
    """Whole forward pass fused in VMEM.

    Feature-major & group-packed: x_ref is (G*5, block_cols) with the batch on the
    128-wide lane axis and G independent batch groups stacked along the feature
    (sublane) axis. Weights are block-diagonal packs of G copies, so each dot uses
    ~120 of the MXU's rows / contraction lanes instead of 20. Accumulation is f32.
    """
    cdt = x_ref.dtype  # compute dtype (bf16 by default)
    h = x_ref[...]                                                          # (G*5,  bc)
    h = jnp.dot(w_in[...], h, precision=dot_precision,
                preferred_element_type=jnp.float32) + b_in[...]             # (G*20, bc) f32
    h = jnp.maximum(h, 0.0).astype(cdt)
    for layer in range(w_hid.shape[0]):  # static unroll over fc2..fc5
        h = jnp.dot(w_hid[layer], h, precision=dot_precision,
                    preferred_element_type=jnp.float32) + b_hid[layer]
        h = jnp.maximum(h, 0.0).astype(cdt)
    out = jnp.dot(w_out[...], h, precision=dot_precision,
                  preferred_element_type=jnp.float32) + b_out[...]          # (G, bc), no ReLU
    o_ref[...] = out.astype(o_ref.dtype)  # lane-dense, unmasked full-width store


@functools.partial(jax.jit, static_argnames=("block_b", "group", "compute_dtype"))
def actor_forward(x, params, block_b=2048, group=6, compute_dtype=jnp.bfloat16):
    """x: (B, 5) float32; params: list of (W(out,in), b(out,)) in PyTorch Linear layout.

    block_b:       batch-tile width (multiple of 128); sweep 2048-8192 for large B.
    group:         number of batch groups packed block-diagonally (6 for 128-wide MXU
                   tiles; try 12 if the backend issues 256-wide matmul tiles).
    compute_dtype: bfloat16 (single-pass MXU, f32 accumulate) or float32
                   (precision=HIGHEST, ~3x more MXU passes).
    """
    B, F = x.shape
    assert F == DIMS[0], f"expected {DIMS[0]} input features, got {F}"
    assert block_b % LANE == 0, "block_b must be a multiple of 128 (lane width)"
    G = int(group)

    # ---- pack x: (B, 5) -> (G*5, Bg). Pad only to lane granularity (G*128), not block_b.
    B_pad = _round_up(B, G * LANE)
    Bg = B_pad // G
    x_p = jnp.pad(x.astype(jnp.float32), ((0, B_pad - B), (0, 0)))
    x_packed = (x_p.reshape(G, Bg, F)
                   .transpose(0, 2, 1)
                   .reshape(G * F, Bg)
                   .astype(compute_dtype))
    # TODO(synk): ideally the producer emits x already in this packed feature-major
    # (G*F, Bg) layout so this (single, fused) pad/transpose pass over x disappears.

    # ---- block-diagonal weight packing: G independent batch groups share one matmul.
    eye = jnp.eye(G, dtype=jnp.float32)

    def pack_w(w):  # (out, in) -> (G*out, G*in), block-diagonal
        return jnp.kron(eye, w).astype(compute_dtype)

    def pack_b(b):  # (out,) -> (G*out, 1), biases stay f32 (added to f32 accumulators)
        return jnp.tile(b, G).reshape(-1, 1).astype(jnp.float32)

    (w1, b1), (w2, b2), (w3, b3), (w4, b4), (w5, b5), (w6, b6) = params
    w_in, b_in = pack_w(w1), pack_b(b1)                           # (G*20, G*5), (G*20, 1)
    w_hid = jnp.stack([pack_w(w) for w in (w2, w3, w4, w5)])      # (4, G*20, G*20)
    b_hid = jnp.stack([pack_b(b) for b in (b2, b3, b4, b5)])      # (4, G*20, 1)
    w_out, b_out = pack_w(w6), pack_b(b6)                         # (G, G*20), (G, 1)

    # ---- batch tile: big (amortize per-step overhead), but keep >= 2 grid steps when
    # possible so v7x's 2 TensorCores both get work via the "parallel" grid axis.
    if Bg >= 2 * LANE:
        block_cols = min(block_b, _round_up(Bg // 2, LANE))
    else:
        block_cols = Bg
    grid = (pl.cdiv(Bg, block_cols),)  # trailing partial tile allowed; OOB store is masked

    # Pin matmul precision: bf16 operands -> single-pass MXU (DEFAULT); f32 -> HIGHEST.
    dot_precision = (jax.lax.Precision.HIGHEST
                     if jnp.dtype(compute_dtype) == jnp.dtype(jnp.float32)
                     else jax.lax.Precision.DEFAULT)

    in_specs = [
        pl.BlockSpec((G * F, block_cols), lambda i: (0, i)),      # x: tiled over batch
        pl.BlockSpec(w_in.shape, lambda i: (0, 0)),               # weights/biases: constant
        pl.BlockSpec(b_in.shape, lambda i: (0, 0)),               #   block index -> loaded
        pl.BlockSpec(w_hid.shape, lambda i: (0, 0, 0)),           #   once, reused each step
        pl.BlockSpec(b_hid.shape, lambda i: (0, 0, 0)),
        pl.BlockSpec(w_out.shape, lambda i: (0, 0)),
        pl.BlockSpec(b_out.shape, lambda i: (0, 0)),
    ]
    out_spec = pl.BlockSpec((G, block_cols), lambda i: (0, i))

    # Raise the scoped VMEM limit only when huge tiles need it (v5e default is 16 MiB).
    bytes_per_col = (2 * G * F * jnp.dtype(compute_dtype).itemsize   # x, double-buffered
                     + 2 * G * 4                                     # out, double-buffered
                     + 6 * G * DIMS[1] * 4)                          # f32 intermediates
    est_vmem = block_cols * bytes_per_col + (1 << 20)
    vmem_limit = None if est_vmem < 12 * 1024 * 1024 else int(min(2 * est_vmem, 64 * 1024 * 1024))

    out_packed = pl.pallas_call(
        functools.partial(actor_kernel, dot_precision),
        out_shape=jax.ShapeDtypeStruct((G, Bg), jnp.float32),
        grid_spec=pltpu.PrefetchScalarGridSpec(
            num_scalar_prefetch=0,
            grid=grid,
            in_specs=in_specs,
            out_specs=out_spec,
        ),
        compiler_params=pltpu.CompilerParams(
            dimension_semantics=("parallel",),
            vmem_limit_bytes=vmem_limit),
    )(x_packed, w_in, b_in, w_hid, b_hid, w_out, b_out)

    # Rows of out_packed are contiguous batch groups -> row-major flatten restores the
    # original batch order; slicing to B drops exactly the padded columns.
    return out_packed.reshape(G * Bg, 1)[:B]


def init_params(key):
    """Deterministic init mimicking PyTorch nn.Linear default U(-1/sqrt(fan_in), +)."""
    params = []
    for fan_in, fan_out in zip(DIMS[:-1], DIMS[1:]):
        kw, kb, key = jax.random.split(key, 3)
        bound = 1.0 / (fan_in ** 0.5)
        w = jax.random.uniform(kw, (fan_out, fan_in), jnp.float32, -bound, bound)  # (out, in)
        b = jax.random.uniform(kb, (fan_out,), jnp.float32, -bound, bound)
        params.append((w, b))
    return params


def actor_reference(x, params, compute_dtype=jnp.bfloat16):
    """Pure-JAX reference mirroring the kernel's pinned precision (PyTorch semantics)."""
    prec = (jax.lax.Precision.HIGHEST
            if jnp.dtype(compute_dtype) == jnp.dtype(jnp.float32)
            else jax.lax.Precision.DEFAULT)
    h = x.astype(compute_dtype)
    n = len(params)
    for i, (w, b) in enumerate(params):
        h = jnp.dot(h, w.astype(compute_dtype).T, precision=prec,
                    preferred_element_type=jnp.float32) + b
        if i < n - 1:
            h = jnp.maximum(h, 0.0).astype(compute_dtype)
    return h  # final layer: no ReLU, f32


if __name__ == "__main__":
    key = jax.random.PRNGKey(0)
    kx, kp = jax.random.split(key)
    params = init_params(kp)

    # Small demo shapes:
    #   B=300  -> exercises lane-granularity padding, single grid step.
    #   B=2000 -> exercises a multi-step "parallel" grid with a partial trailing tile.
    for B in (300, 2000):
        x = jax.random.normal(kx, (B, DIMS[0]), jnp.float32)
        out = jax.block_until_ready(actor_forward(x, params))
        ref = actor_reference(x, params)
        assert out.shape == (B, 1), out.shape
        # bf16 operands are cast identically in kernel and reference; remaining delta is
        # f32 accumulation-order noise plus occasional 1-ulp bf16 re-rounds of activations.
        err = float(jnp.max(jnp.abs(out - ref)))
        assert jnp.allclose(out, ref, atol=1e-2, rtol=1e-2), f"mismatch at B={B}: max err {err}"
    print("KERNEL_OK")
</pallas_src>

<mosaic_0001>
module attributes {stable_mosaic.version = 11 : i64} {
  func.func @actor_kernel(%arg0: i32, %arg1: memref<30x128xbf16, #tpu.memory_space<vmem>>, %arg2: memref<120x30xbf16, #tpu.memory_space<vmem>>, %arg3: memref<120x1xf32, #tpu.memory_space<vmem>>, %arg4: memref<4x120x120xbf16, #tpu.memory_space<vmem>>, %arg5: memref<4x120x1xf32, #tpu.memory_space<vmem>>, %arg6: memref<6x120xbf16, #tpu.memory_space<vmem>>, %arg7: memref<6x1xf32, #tpu.memory_space<vmem>>, %arg8: memref<6x128xf32, #tpu.memory_space<vmem>>) attributes {dimension_semantics = [#tpu.dimension_semantics<parallel>], iteration_bounds = array<i64: 1>, scalar_prefetch = 0 : i64, scratch_operands = 0 : i64, tpu.core_type = #tpu.core_type<tc>, window_params = [{transform_indices = @transform_0, window_bounds = array<i64: 30, 128>}, {pipeline_mode = #tpu.pipeline_mode<synchronous>, transform_indices = @transform_1, window_bounds = array<i64: 120, 30>}, {pipeline_mode = #tpu.pipeline_mode<synchronous>, transform_indices = @transform_2, window_bounds = array<i64: 120, 1>}, {pipeline_mode = #tpu.pipeline_mode<synchronous>, transform_indices = @transform_3, window_bounds = array<i64: 4, 120, 120>}, {pipeline_mode = #tpu.pipeline_mode<synchronous>, transform_indices = @transform_4, window_bounds = array<i64: 4, 120, 1>}, {pipeline_mode = #tpu.pipeline_mode<synchronous>, transform_indices = @transform_5, window_bounds = array<i64: 6, 120>}, {pipeline_mode = #tpu.pipeline_mode<synchronous>, transform_indices = @transform_6, window_bounds = array<i64: 6, 1>}, {transform_indices = @transform_7, window_bounds = array<i64: 6, 128>}]} {
    %c0 = arith.constant 0 : index
    %c0_0 = arith.constant 0 : index
    %0 = vector.load %arg1[%c0, %c0_0] : memref<30x128xbf16, #tpu.memory_space<vmem>>, vector<30x128xbf16>
    %c0_1 = arith.constant 0 : index
    %c0_2 = arith.constant 0 : index
    %1 = vector.load %arg2[%c0_1, %c0_2] : memref<120x30xbf16, #tpu.memory_space<vmem>>, vector<120x30xbf16>
    %cst = arith.constant dense<0.000000e+00> : vector<120x128xf32>
    %2 = tpu.matmul %1, %0, %cst {dimension_numbers = #tpu.dot_dimension_numbers<[1], [0], [0], [1], [0, 0, 1, 1], [], []>} : vector<120x30xbf16>, vector<30x128xbf16>, vector<120x128xf32> -> vector<120x128xf32>
    %c0_3 = arith.constant 0 : index
    %c0_4 = arith.constant 0 : index
    %3 = vector.load %arg3[%c0_3, %c0_4] : memref<120x1xf32, #tpu.memory_space<vmem>>, vector<120x1xf32>
    %4 = vector.broadcast %3 : vector<120x1xf32> to vector<120x128xf32>
    %5 = arith.addf %2, %4 : vector<120x128xf32>
    %cst_5 = arith.constant 0.000000e+00 : f32
    %6 = vector.broadcast %cst_5 : f32 to vector<120x128xf32>
    %7 = arith.maximumf %5, %6 : vector<120x128xf32>
    %8 = arith.truncf %7 : vector<120x128xf32> to vector<120x128xbf16>
    %c0_6 = arith.constant 0 : index
    %c0_7 = arith.constant 0 : index
    %c0_8 = arith.constant 0 : index
    %9 = vector.load %arg4[%c0_6, %c0_7, %c0_8] : memref<4x120x120xbf16, #tpu.memory_space<vmem>>, vector<1x120x120xbf16>
    %10 = vector.shape_cast %9 : vector<1x120x120xbf16> to vector<120x120xbf16>
    %cst_9 = arith.constant dense<0.000000e+00> : vector<120x128xf32>
    %11 = tpu.matmul %10, %8, %cst_9 {dimension_numbers = #tpu.dot_dimension_numbers<[1], [0], [0], [1], [0, 0, 1, 1], [], []>} : vector<120x120xbf16>, vector<120x128xbf16>, vector<120x128xf32> -> vector<120x128xf32>
    %c0_10 = arith.constant 0 : index
    %c0_11 = arith.constant 0 : index
    %c0_12 = arith.constant 0 : index
    %12 = vector.load %arg5[%c0_10, %c0_11, %c0_12] : memref<4x120x1xf32, #tpu.memory_space<vmem>>, vector<1x120x1xf32>
    %13 = vector.shape_cast %12 : vector<1x120x1xf32> to vector<120x1xf32>
    %14 = vector.broadcast %13 : vector<120x1xf32> to vector<120x128xf32>
    %15 = arith.addf %11, %14 : vector<120x128xf32>
    %cst_13 = arith.constant 0.000000e+00 : f32
    %16 = vector.broadcast %cst_13 : f32 to vector<120x128xf32>
    %17 = arith.maximumf %15, %16 : vector<120x128xf32>
    %18 = arith.truncf %17 : vector<120x128xf32> to vector<120x128xbf16>
    %c1 = arith.constant 1 : index
    %c0_14 = arith.constant 0 : index
    %c0_15 = arith.constant 0 : index
    %19 = vector.load %arg4[%c1, %c0_14, %c0_15] : memref<4x120x120xbf16, #tpu.memory_space<vmem>>, vector<1x120x120xbf16>
    %20 = vector.shape_cast %19 : vector<1x120x120xbf16> to vector<120x120xbf16>
    %cst_16 = arith.constant dense<0.000000e+00> : vector<120x128xf32>
    %21 = tpu.matmul %20, %18, %cst_16 {dimension_numbers = #tpu.dot_dimension_numbers<[1], [0], [0], [1], [0, 0, 1, 1], [], []>} : vector<120x120xbf16>, vector<120x128xbf16>, vector<120x128xf32> -> vector<120x128xf32>
    %c1_17 = arith.constant 1 : index
    %c0_18 = arith.constant 0 : index
    %c0_19 = arith.constant 0 : index
    %22 = vector.load %arg5[%c1_17, %c0_18, %c0_19] : memref<4x120x1xf32, #tpu.memory_space<vmem>>, vector<1x120x1xf32>
    %23 = vector.shape_cast %22 : vector<1x120x1xf32> to vector<120x1xf32>
    %24 = vector.broadcast %23 : vector<120x1xf32> to vector<120x128xf32>
    %25 = arith.addf %21, %24 : vector<120x128xf32>
    %cst_20 = arith.constant 0.000000e+00 : f32
    %26 = vector.broadcast %cst_20 : f32 to vector<120x128xf32>
    %27 = arith.maximumf %25, %26 : vector<120x128xf32>
    %28 = arith.truncf %27 : vector<120x128xf32> to vector<120x128xbf16>
    %c2 = arith.constant 2 : index
    %c0_21 = arith.constant 0 : index
    %c0_22 = arith.constant 0 : index
    %29 = vector.load %arg4[%c2, %c0_21, %c0_22] : memref<4x120x120xbf16, #tpu.memory_space<vmem>>, vector<1x120x120xbf16>
    %30 = vector.shape_cast %29 : vector<1x120x120xbf16> to vector<120x120xbf16>
    %cst_23 = arith.constant dense<0.000000e+00> : vector<120x128xf32>
    %31 = tpu.matmul %30, %28, %cst_23 {dimension_numbers = #tpu.dot_dimension_numbers<[1], [0], [0], [1], [0, 0, 1, 1], [], []>} : vector<120x120xbf16>, vector<120x128xbf16>, vector<120x128xf32> -> vector<120x128xf32>
    %c2_24 = arith.constant 2 : index
    %c0_25 = arith.constant 0 : index
    %c0_26 = arith.constant 0 : index
    %32 = vector.load %arg5[%c2_24, %c0_25, %c0_26] : memref<4x120x1xf32, #tpu.memory_space<vmem>>, vector<1x120x1xf32>
    %33 = vector.shape_cast %32 : vector<1x120x1xf32> to vector<120x1xf32>
    %34 = vector.broadcast %33 : vector<120x1xf32> to vector<120x128xf32>
    %35 = arith.addf %31, %34 : vector<120x128xf32>
    %cst_27 = arith.constant 0.000000e+00 : f32
    %36 = vector.broadcast %cst_27 : f32 to vector<120x128xf32>
    %37 = arith.maximumf %35, %36 : vector<120x128xf32>
    %38 = arith.truncf %37 : vector<120x128xf32> to vector<120x128xbf16>
    %c3 = arith.constant 3 : index
    %c0_28 = arith.constant 0 : index
    %c0_29 = arith.constant 0 : index
    %39 = vector.load %arg4[%c3, %c0_28, %c0_29] : memref<4x120x120xbf16, #tpu.memory_space<vmem>>, vector<1x120x120xbf16>
    %40 = vector.shape_cast %39 : vector<1x120x120xbf16> to vector<120x120xbf16>
    %cst_30 = arith.constant dense<0.000000e+00> : vector<120x128xf32>
    %41 = tpu.matmul %40, %38, %cst_30 {dimension_numbers = #tpu.dot_dimension_numbers<[1], [0], [0], [1], [0, 0, 1, 1], [], []>} : vector<120x120xbf16>, vector<120x128xbf16>, vector<120x128xf32> -> vector<120x128xf32>
    %c3_31 = arith.constant 3 : index
    %c0_32 = arith.constant 0 : index
    %c0_33 = arith.constant 0 : index
    %42 = vector.load %arg5[%c3_31, %c0_32, %c0_33] : memref<4x120x1xf32, #tpu.memory_space<vmem>>, vector<1x120x1xf32>
    %43 = vector.shape_cast %42 : vector<1x120x1xf32> to vector<120x1xf32>
    %44 = vector.broadcast %43 : vector<120x1xf32> to vector<120x128xf32>
    %45 = arith.addf %41, %44 : vector<120x128xf32>
    %cst_34 = arith.constant 0.000000e+00 : f32
    %46 = vector.broadcast %cst_34 : f32 to vector<120x128xf32>
    %47 = arith.maximumf %45, %46 : vector<120x128xf32>
    %48 = arith.truncf %47 : vector<120x128xf32> to vector<120x128xbf16>
    %c0_35 = arith.constant 0 : index
    %c0_36 = arith.constant 0 : index
    %49 = vector.load %arg6[%c0_35, %c0_36] : memref<6x120xbf16, #tpu.memory_space<vmem>>, vector<6x120xbf16>
    %cst_37 = arith.constant dense<0.000000e+00> : vector<6x128xf32>
    %50 = tpu.matmul %49, %48, %cst_37 {dimension_numbers = #tpu.dot_dimension_numbers<[1], [0], [0], [1], [0, 0, 1, 1], [], []>} : vector<6x120xbf16>, vector<120x128xbf16>, vector<6x128xf32> -> vector<6x128xf32>
    %c0_38 = arith.constant 0 : index
    %c0_39 = arith.constant 0 : index
    %51 = vector.load %arg7[%c0_38, %c0_39] : memref<6x1xf32, #tpu.memory_space<vmem>>, vector<6x1xf32>
    %52 = vector.broadcast %51 : vector<6x1xf32> to vector<6x128xf32>
    %53 = arith.addf %50, %52 : vector<6x128xf32>
    %c0_40 = arith.constant 0 : index
    %c0_41 = arith.constant 0 : index
    %54 = vector.load %arg8[%c0_40, %c0_41] : memref<6x128xf32, #tpu.memory_space<vmem>>, vector<6x128xf32>
    tpu.vector_store %arg8[%c0_40, %c0_41], %53 {strides = array<i32>} : memref<6x128xf32, #tpu.memory_space<vmem>>, vector<6x128xf32>,
    return
  }
  func.func @transform_0(%arg0: i32) -> (i32, i32) {
    %c0_i32 = arith.constant 0 : i32
    %c0_i32_0 = arith.constant 0 : i32
    return %c0_i32, %arg0 : i32, i32
  }
  func.func @transform_1(%arg0: i32) -> (i32, i32) {
    %c0_i32 = arith.constant 0 : i32
    %c0_i32_0 = arith.constant 0 : i32
    %c0_i32_1 = arith.constant 0 : i32
    return %c0_i32, %c0_i32_0 : i32, i32
  }
  func.func @transform_2(%arg0: i32) -> (i32, i32) {
    %c0_i32 = arith.constant 0 : i32
    %c0_i32_0 = arith.constant 0 : i32
    %c0_i32_1 = arith.constant 0 : i32
    return %c0_i32, %c0_i32_0 : i32, i32
  }
  func.func @transform_3(%arg0: i32) -> (i32, i32, i32) {
    %c0_i32 = arith.constant 0 : i32
    %c0_i32_0 = arith.constant 0 : i32
    %c0_i32_1 = arith.constant 0 : i32
    %c0_i32_2 = arith.constant 0 : i32
    return %c0_i32, %c0_i32_0, %c0_i32_1 : i32, i32, i32
  }
  func.func @transform_4(%arg0: i32) -> (i32, i32, i32) {
    %c0_i32 = arith.constant 0 : i32
    %c0_i32_0 = arith.constant 0 : i32
    %c0_i32_1 = arith.constant 0 : i32
    %c0_i32_2 = arith.constant 0 : i32
    return %c0_i32, %c0_i32_0, %c0_i32_1 : i32, i32, i32
  }
  func.func @transform_5(%arg0: i32) -> (i32, i32) {
    %c0_i32 = arith.constant 0 : i32
    %c0_i32_0 = arith.constant 0 : i32
    %c0_i32_1 = arith.constant 0 : i32
    return %c0_i32, %c0_i32_0 : i32, i32
  }
  func.func @transform_6(%arg0: i32) -> (i32, i32) {
    %c0_i32 = arith.constant 0 : i32
    %c0_i32_0 = arith.constant 0 : i32
    %c0_i32_1 = arith.constant 0 : i32
    return %c0_i32, %c0_i32_0 : i32, i32
  }
  func.func @transform_7(%arg0: i32) -> (i32, i32) {
    %c0_i32 = arith.constant 0 : i32
    %c0_i32_0 = arith.constant 0 : i32
    return %c0_i32, %arg0 : i32, i32
  }
}

</mosaic_0001>

<llo_original>
// kernel: tile.1
$region0: #{tile.1}
  %s0 = inlined_call_operand.vmem [shape: f32[6,20], index: 0, kind: input, shape index: {}]
  %s1 = inlined_call_operand.vmem [shape: f32[1,120,1], index: 1, kind: output, shape index: {}]
  %v2 = vld [vmem:[%s0] sm:$0x3f]
  %vm3 = vcmask 7168
  %4 = vst.msk [vmem:[%s1] ss:$20 sm:$0x3f] %vm3, %v2
  %v5 = vld.sshfl [vmem:[%s0] sm:$0xff pattern:$0x33314250]
  %6 = vrot.lane.b32.xlu0 %v5, 127
  %v7 = vpop.permute.xlu0 %6
  %vm8 = vcmask 7168
  %s9 = scalar_lea.vmem %s1, 1
  %10 = vst.msk [vmem:[%s9] ss:$100 sm:$0x3] %vm8, %v7
  %s11 = scalar_lea.vmem %s1, 4294967257
  %12 = vst.msk [vmem:[%s11] ss:$40 sm:$0xc] %vm8, %v7
  %s13 = scalar_lea.vmem %s1, 4294967157
  %14 = vst.msk [vmem:[%s13] ss:$40 sm:$0x30] %vm8, %v7
  %v15 = vld.sshfl [vmem:[%s0] sm:$0xff pattern:$0x33314250]
  %16 = vrot.lane.b32.xlu0 %v15, 126
  %v17 = vpop.permute.xlu0 %16
  %vm18 = vcmask 7168
  %s19 = scalar_lea.vmem %s1, 2
  %20 = vst.msk [vmem:[%s19] ss:$100 sm:$0x3] %vm18, %v17
  %s21 = scalar_lea.vmem %s1, 4294967258
  %22 = vst.msk [vmem:[%s21] ss:$40 sm:$0xc] %vm18, %v17
  %s23 = scalar_lea.vmem %s1, 4294967158
  %24 = vst.msk [vmem:[%s23] ss:$40 sm:$0x30] %vm18, %v17
  %v25 = vld.sshfl [vmem:[%s0] sm:$0xff pattern:$0x33314250]
  %26 = vrot.lane.b32.xlu0 %v25, 125
  %v27 = vpop.permute.xlu0 %26
  %vm28 = vcmask 7168
  %s29 = scalar_lea.vmem %s1, 3
  %30 = vst.msk [vmem:[%s29] ss:$100 sm:$0x3] %vm28, %v27
  %s31 = scalar_lea.vmem %s1, 4294967259
  %32 = vst.msk [vmem:[%s31] ss:$40 sm:$0xc] %vm28, %v27
  %s33 = scalar_lea.vmem %s1, 4294967159
  %34 = vst.msk [vmem:[%s33] ss:$40 sm:$0x30] %vm28, %v27
  %v35 = vld.sshfl [vmem:[%s0] sm:$0xff pattern:$0x11142503]
  %36 = vrot.lane.b32.xlu0 %v35, 124
  %v37 = vpop.permute.xlu0 %36
  %vm38 = vcmask 7168
  %s39 = scalar_lea.vmem %s1, 64
  %40 = vst.msk [vmem:[%s39] ss:$-60 sm:$0x3] %vm38, %v37
  %s41 = scalar_lea.vmem %s1, 224
  %42 = vst.msk [vmem:[%s41] ss:$-60 sm:$0xc] %vm38, %v37
  %s43 = scalar_lea.vmem %s1, 324
  %44 = vst.msk [vmem:[%s43] ss:$-60 sm:$0x30] %vm38, %v37
  %v45 = vld.sshfl [vmem:[%s0] sm:$0xff pattern:$0x11142503]
  %46 = vrot.lane.b32.xlu0 %v45, 123
  %v47 = vpop.permute.xlu0 %46
  %vm48 = vcmask 7168
  %s49 = scalar_lea.vmem %s1, 65
  %50 = vst.msk [vmem:[%s49] ss:$-60 sm:$0x3] %vm48, %v47
  %s51 = scalar_lea.vmem %s1, 225
  %52 = vst.msk [vmem:[%s51] ss:$-60 sm:$0xc] %vm48, %v47
  %s53 = scalar_lea.vmem %s1, 325
  %54 = vst.msk [vmem:[%s53] ss:$-60 sm:$0x30] %vm48, %v47
  %v55 = vld.sshfl [vmem:[%s0] sm:$0xff pattern:$0x11142503]
  %56 = vrot.lane.b32.xlu0 %v55, 122
  %v57 = vpop.permute.xlu0 %56
  %vm58 = vcmask 7168
  %s59 = scalar_lea.vmem %s1, 66
  %60 = vst.msk [vmem:[%s59] ss:$-60 sm:$0x3] %vm58, %v57
  %s61 = scalar_lea.vmem %s1, 226
  %62 = vst.msk [vmem:[%s61] ss:$-60 sm:$0xc] %vm58, %v57
  %s63 = scalar_lea.vmem %s1, 326
  %64 = vst.msk [vmem:[%s63] ss:$-60 sm:$0x30] %vm58, %v57
  %v65 = vld.sshfl [vmem:[%s0] sm:$0xff pattern:$0x11142503]
  %66 = vrot.lane.b32.xlu0 %v65, 121
  %v67 = vpop.permute.xlu0 %66
  %vm68 = vcmask 7168
  %s69 = scalar_lea.vmem %s1, 67
  %70 = vst.msk [vmem:[%s69] ss:$-60 sm:$0x3] %vm68, %v67
  %s71 = scalar_lea.vmem %s1, 227
  %72 = vst.msk [vmem:[%s71] ss:$-60 sm:$0xc] %vm68, %v67
  %s73 = scalar_lea.vmem %s1, 327
  %74 = vst.msk [vmem:[%s73] ss:$-60 sm:$0x30] %vm68, %v67
  %v75 = vld.sshfl [vmem:[%s0] sm:$0xff pattern:$0x11142503]
  %76 = vrot.lane.b32.xlu0 %v75, 120
  %v77 = vpop.permute.xlu0 %76
  %vm78 = vcmask 7168
  %s79 = scalar_lea.vmem %s1, 68
  %80 = vst.msk [vmem:[%s79] ss:$-60 sm:$0x3] %vm78, %v77
  %s81 = scalar_lea.vmem %s1, 228
  %82 = vst.msk [vmem:[%s81] ss:$-60 sm:$0xc] %vm78, %v77
  %s83 = scalar_lea.vmem %s1, 328
  %84 = vst.msk [vmem:[%s83] ss:$-60 sm:$0x30] %vm78, %v77
  %v85 = vld.sshfl [vmem:[%s0] sm:$0xff pattern:$0x11142503]
  %86 = vrot.lane.b32.xlu0 %v85, 119
  %v87 = vpop.permute.xlu0 %86
  %vm88 = vcmask 7168
  %s89 = scalar_lea.vmem %s1, 69
  %90 = vst.msk [vmem:[%s89] ss:$-60 sm:$0x3] %vm88, %v87
  %s91 = scalar_lea.vmem %s1, 229
  %92 = vst.msk [vmem:[%s91] ss:$-60 sm:$0xc] %vm88, %v87
  %s93 = scalar_lea.vmem %s1, 329
  %94 = vst.msk [vmem:[%s93] ss:$-60 sm:$0x30] %vm88, %v87
  %v95 = vld.sshfl [vmem:[%s0] sm:$0xff pattern:$0x11142503]
  %96 = vrot.lane.b32.xlu0 %v95, 118
  %v97 = vpop.permute.xlu0 %96
  %vm98 = vcmask 7168
  %s99 = scalar_lea.vmem %s1, 70
  %100 = vst.msk [vmem:[%s99] ss:$-60 sm:$0x3] %vm98, %v97
  %s101 = scalar_lea.vmem %s1, 230
  %102 = vst.msk [vmem:[%s101] ss:$-60 sm:$0xc] %vm98, %v97
  %s103 = scalar_lea.vmem %s1, 330
  %104 = vst.msk [vmem:[%s103] ss:$-60 sm:$0x30] %vm98, %v97
  %v105 = vld.sshfl [vmem:[%s0] sm:$0xff pattern:$0x11142503]
  %106 = vrot.lane.b32.xlu0 %v105, 117
  %v107 = vpop.permute.xlu0 %106
  %vm108 = vcmask 7168
  %s109 = scalar_lea.vmem %s1, 71
  %110 = vst.msk [vmem:[%s109] ss:$-60 sm:$0x3] %vm108, %v107
  %s111 = scalar_lea.vmem %s1, 231
  %112 = vst.msk [vmem:[%s111] ss:$-60 sm:$0xc] %vm108, %v107
  %s113 = scalar_lea.vmem %s1, 331
  %114 = vst.msk [vmem:[%s113] ss:$-60 sm:$0x30] %vm108, %v107
  %v115 = vld.sshfl [vmem:[%s0] sm:$0xff pattern:$0x44425031]
  %116 = vrot.lane.b32.xlu0 %v115, 116
  %v117 = vpop.permute.xlu0 %116
  %vm118 = vcmask 7168
  %s119 = scalar_lea.vmem %s1, 32
  %120 = vst.msk [vmem:[%s119] ss:$40 sm:$0x3] %vm118, %v117
  %s121 = scalar_lea.vmem %s1, 4294967108
  %122 = vst.msk [vmem:[%s121] ss:$100 sm:$0xc] %vm118, %v117
  %s123 = scalar_lea.vmem %s1, 4294967188
  %124 = vst.msk [vmem:[%s123] ss:$40 sm:$0x30] %vm118, %v117
  %v125 = vld.sshfl [vmem:[%s0] sm:$0xff pattern:$0x44425031]
  %126 = vrot.lane.b32.xlu0 %v125, 115
  %v127 = vpop.permute.xlu0 %126
  %vm128 = vcmask 7168
  %s129 = scalar_lea.vmem %s1, 33
  %130 = vst.msk [vmem:[%s129] ss:$40 sm:$0x3] %vm128, %v127
  %s131 = scalar_lea.vmem %s1, 4294967109
  %132 = vst.msk [vmem:[%s131] ss:$100 sm:$0xc] %vm128, %v127
  %s133 = scalar_lea.vmem %s1, 4294967189
  %134 = vst.msk [vmem:[%s133] ss:$40 sm:$0x30] %vm128, %v127
  %v135 = vld.sshfl [vmem:[%s0] sm:$0xff pattern:$0x44425031]
  %136 = vrot.lane.b32.xlu0 %v135, 114
  %v137 = vpop.permute.xlu0 %136
  %vm138 = vcmask 7168
  %s139 = scalar_lea.vmem %s1, 34
  %140 = vst.msk [vmem:[%s139] ss:$40 sm:$0x3] %vm138, %v137
  %s141 = scalar_lea.vmem %s1, 4294967110
  %142 = vst.msk [vmem:[%s141] ss:$100 sm:$0xc] %vm138, %v137
  %s143 = scalar_lea.vmem %s1, 4294967190
  %144 = vst.msk [vmem:[%s143] ss:$40 sm:$0x30] %vm138, %v137
  %v145 = vld.sshfl [vmem:[%s0] sm:$0xff pattern:$0x44425031]
  %146 = vrot.lane.b32.xlu0 %v145, 113
  %v147 = vpop.permute.xlu0 %146
  %vm148 = vcmask 7168
  %s149 = scalar_lea.vmem %s1, 35
  %150 = vst.msk [vmem:[%s149] ss:$40 sm:$0x3] %vm148, %v147
  %s151 = scalar_lea.vmem %s1, 4294967111
  %152 = vst.msk [vmem:[%s151] ss:$100 sm:$0xc] %vm148, %v147
  %s153 = scalar_lea.vmem %s1, 4294967191
  %154 = vst.msk [vmem:[%s153] ss:$40 sm:$0x30] %vm148, %v147
  %v155 = vld.sshfl [vmem:[%s0] sm:$0xff pattern:$0x22250314]
  %156 = vrot.lane.b32.xlu0 %v155, 112
  %v157 = vpop.permute.xlu0 %156
  %vm158 = vcmask 7168
  %s159 = scalar_lea.vmem %s1, 96
  %160 = vst.msk [vmem:[%s159] ss:$-60 sm:$0x3] %vm158, %v157
  %s161 = scalar_lea.vmem %s1, 196
  %162 = vst.msk [vmem:[%s161] ss:$-60 sm:$0xc] %vm158, %v157
  %s163 = scalar_lea.vmem %s1, 356
  %164 = vst.msk [vmem:[%s163] ss:$-60 sm:$0x30] %vm158, %v157
  %v165 = vld.sshfl [vmem:[%s0] sm:$0xff pattern:$0x22250314]
  %166 = vrot.lane.b32.xlu0 %v165, 111
  %v167 = vpop.permute.xlu0 %166
  %vm168 = vcmask 7168
  %s169 = scalar_lea.vmem %s1, 97
  %170 = vst.msk [vmem:[%s169] ss:$-60 sm:$0x3] %vm168, %v167
  %s171 = scalar_lea.vmem %s1, 197
  %172 = vst.msk [vmem:[%s171] ss:$-60 sm:$0xc] %vm168, %v167
  %s173 = scalar_lea.vmem %s1, 357
  %174 = vst.msk [vmem:[%s173] ss:$-60 sm:$0x30] %vm168, %v167
  %v175 = vld.sshfl [vmem:[%s0] sm:$0xff pattern:$0x22250314]
  %176 = vrot.lane.b32.xlu0 %v175, 110
  %v177 = vpop.permute.xlu0 %176
  %vm178 = vcmask 7168
  %s179 = scalar_lea.vmem %s1, 98
  %180 = vst.msk [vmem:[%s179] ss:$-60 sm:$0x3] %vm178, %v177
  %s181 = scalar_lea.vmem %s1, 198
  %182 = vst.msk [vmem:[%s181] ss:$-60 sm:$0xc] %vm178, %v177
  %s183 = scalar_lea.vmem %s1, 358
  %184 = vst.msk [vmem:[%s183] ss:$-60 sm:$0x30] %vm178, %v177
  %v185 = vld.sshfl [vmem:[%s0] sm:$0xff pattern:$0x22250314]
  %186 = vrot.lane.b32.xlu0 %v185, 109
  %v187 = vpop.permute.xlu0 %186
  %vm188 = vcmask 7168
  %s189 = scalar_lea.vmem %s1, 99
  %190 = vst.msk [vmem:[%s189] ss:$-60 sm:$0x3] %vm188, %v187
  %s191 = scalar_lea.vmem %s1, 199
  %192 = vst.msk [vmem:[%s191] ss:$-60 sm:$0xc] %vm188, %v187
  %s193 = scalar_lea.vmem %s1, 359
  %194 = vst.msk [vmem:[%s193] ss:$-60 sm:$0x30] %vm188, %v187

// kernel: tile.0
$region0: #{tile.0}
  %s0 = inlined_call_operand.vmem [shape: f32[6,20], index: 0, kind: input, shape index: {}]
  %s1 = inlined_call_operand.vmem [shape: f32[120,1], index: 1, kind: output, shape index: {}]
  %v2 = vld [vmem:[%s0] sm:$0x3f]
  %vm3 = vcmask 7168
  %4 = vst.msk [vmem:[%s1] ss:$20 sm:$0x3f] %vm3, %v2
  %v5 = vld.sshfl [vmem:[%s0] sm:$0xff pattern:$0x33314250]
  %6 = vrot.lane.b32.xlu0 %v5, 127
  %v7 = vpop.permute.xlu0 %6
  %vm8 = vcmask 7168
  %s9 = scalar_lea.vmem %s1, 1
  %10 = vst.msk [vmem:[%s9] ss:$100 sm:$0x3] %vm8, %v7
  %s11 = scalar_lea.vmem %s1, 4294967257
  %12 = vst.msk [vmem:[%s11] ss:$40 sm:$0xc] %vm8, %v7
  %s13 = scalar_lea.vmem %s1, 4294967157
  %14 = vst.msk [vmem:[%s13] ss:$40 sm:$0x30] %vm8, %v7
  %v15 = vld.sshfl [vmem:[%s0] sm:$0xff pattern:$0x33314250]
  %16 = vrot.lane.b32.xlu0 %v15, 126
  %v17 = vpop.permute.xlu0 %16
  %vm18 = vcmask 7168
  %s19 = scalar_lea.vmem %s1, 2
  %20 = vst.msk [vmem:[%s19] ss:$100 sm:$0x3] %vm18, %v17
  %s21 = scalar_lea.vmem %s1, 4294967258
  %22 = vst.msk [vmem:[%s21] ss:$40 sm:$0xc] %vm18, %v17
  %s23 = scalar_lea.vmem %s1, 4294967158
  %24 = vst.msk [vmem:[%s23] ss:$40 sm:$0x30] %vm18, %v17
  %v25 = vld.sshfl [vmem:[%s0] sm:$0xff pattern:$0x33314250]
  %26 = vrot.lane.b32.xlu0 %v25, 125
  %v27 = vpop.permute.xlu0 %26
  %vm28 = vcmask 7168
  %s29 = scalar_lea.vmem %s1, 3
  %30 = vst.msk [vmem:[%s29] ss:$100 sm:$0x3] %vm28, %v27
  %s31 = scalar_lea.vmem %s1, 4294967259
  %32 = vst.msk [vmem:[%s31] ss:$40 sm:$0xc] %vm28, %v27
  %s33 = scalar_lea.vmem %s1, 4294967159
  %34 = vst.msk [vmem:[%s33] ss:$40 sm:$0x30] %vm28, %v27
  %v35 = vld.sshfl [vmem:[%s0] sm:$0xff pattern:$0x11142503]
  %36 = vrot.lane.b32.xlu0 %v35, 124
  %v37 = vpop.permute.xlu0 %36
  %vm38 = vcmask 7168
  %s39 = scalar_lea.vmem %s1, 64
  %40 = vst.msk [vmem:[%s39] ss:$-60 sm:$0x3] %vm38, %v37
  %s41 = scalar_lea.vmem %s1, 224
  %42 = vst.msk [vmem:[%s41] ss:$-60 sm:$0xc] %vm38, %v37
  %s43 = scalar_lea.vmem %s1, 324
  %44 = vst.msk [vmem:[%s43] ss:$-60 sm:$0x30] %vm38, %v37
  %v45 = vld.sshfl [vmem:[%s0] sm:$0xff pattern:$0x11142503]
  %46 = vrot.lane.b32.xlu0 %v45, 123
  %v47 = vpop.permute.xlu0 %46
  %vm48 = vcmask 7168
  %s49 = scalar_lea.vmem %s1, 65
  %50 = vst.msk [vmem:[%s49] ss:$-60 sm:$0x3] %vm48, %v47
  %s51 = scalar_lea.vmem %s1, 225
  %52 = vst.msk [vmem:[%s51] ss:$-60 sm:$0xc] %vm48, %v47
  %s53 = scalar_lea.vmem %s1, 325
  %54 = vst.msk [vmem:[%s53] ss:$-60 sm:$0x30] %vm48, %v47
  %v55 = vld.sshfl [vmem:[%s0] sm:$0xff pattern:$0x11142503]
  %56 = vrot.lane.b32.xlu0 %v55, 122
  %v57 = vpop.permute.xlu0 %56
  %vm58 = vcmask 7168
  %s59 = scalar_lea.vmem %s1, 66
  %60 = vst.msk [vmem:[%s59] ss:$-60 sm:$0x3] %vm58, %v57
  %s61 = scalar_lea.vmem %s1, 226
  %62 = vst.msk [vmem:[%s61] ss:$-60 sm:$0xc] %vm58, %v57
  %s63 = scalar_lea.vmem %s1, 326
  %64 = vst.msk [vmem:[%s63] ss:$-60 sm:$0x30] %vm58, %v57
  %v65 = vld.sshfl [vmem:[%s0] sm:$0xff pattern:$0x11142503]
  %66 = vrot.lane.b32.xlu0 %v65, 121
  %v67 = vpop.permute.xlu0 %66
  %vm68 = vcmask 7168
  %s69 = scalar_lea.vmem %s1, 67
  %70 = vst.msk [vmem:[%s69] ss:$-60 sm:$0x3] %vm68, %v67
  %s71 = scalar_lea.vmem %s1, 227
  %72 = vst.msk [vmem:[%s71] ss:$-60 sm:$0xc] %vm68, %v67
  %s73 = scalar_lea.vmem %s1, 327
  %74 = vst.msk [vmem:[%s73] ss:$-60 sm:$0x30] %vm68, %v67
  %v75 = vld.sshfl [vmem:[%s0] sm:$0xff pattern:$0x11142503]
  %76 = vrot.lane.b32.xlu0 %v75, 120
  %v77 = vpop.permute.xlu0 %76
  %vm78 = vcmask 7168
  %s79 = scalar_lea.vmem %s1, 68
  %80 = vst.msk [vmem:[%s79] ss:$-60 sm:$0x3] %vm78, %v77
  %s81 = scalar_lea.vmem %s1, 228
  %82 = vst.msk [vmem:[%s81] ss:$-60 sm:$0xc] %vm78, %v77
  %s83 = scalar_lea.vmem %s1, 328
  %84 = vst.msk [vmem:[%s83] ss:$-60 sm:$0x30] %vm78, %v77
  %v85 = vld.sshfl [vmem:[%s0] sm:$0xff pattern:$0x11142503]
  %86 = vrot.lane.b32.xlu0 %v85, 119
  %v87 = vpop.permute.xlu0 %86
  %vm88 = vcmask 7168
  %s89 = scalar_lea.vmem %s1, 69
  %90 = vst.msk [vmem:[%s89] ss:$-60 sm:$0x3] %vm88, %v87
  %s91 = scalar_lea.vmem %s1, 229
  %92 = vst.msk [vmem:[%s91] ss:$-60 sm:$0xc] %vm88, %v87
  %s93 = scalar_lea.vmem %s1, 329
  %94 = vst.msk [vmem:[%s93] ss:$-60 sm:$0x30] %vm88, %v87
  %v95 = vld.sshfl [vmem:[%s0] sm:$0xff pattern:$0x11142503]
  %96 = vrot.lane.b32.xlu0 %v95, 118
  %v97 = vpop.permute.xlu0 %96
  %vm98 = vcmask 7168
  %s99 = scalar_lea.vmem %s1, 70
  %100 = vst.msk [vmem:[%s99] ss:$-60 sm:$0x3] %vm98, %v97
  %s101 = scalar_lea.vmem %s1, 230
  %102 = vst.msk [vmem:[%s101] ss:$-60 sm:$0xc] %vm98, %v97
  %s103 = scalar_lea.vmem %s1, 330
  %104 = vst.msk [vmem:[%s103] ss:$-60 sm:$0x30] %vm98, %v97
  %v105 = vld.sshfl [vmem:[%s0] sm:$0xff pattern:$0x11142503]
  %106 = vrot.lane.b32.xlu0 %v105, 117
  %v107 = vpop.permute.xlu0 %106
  %vm108 = vcmask 7168
  %s109 = scalar_lea.vmem %s1, 71
  %110 = vst.msk [vmem:[%s109] ss:$-60 sm:$0x3] %vm108, %v107
  %s111 = scalar_lea.vmem %s1, 231
  %112 = vst.msk [vmem:[%s111] ss:$-60 sm:$0xc] %vm108, %v107
  %s113 = scalar_lea.vmem %s1, 331
  %114 = vst.msk [vmem:[%s113] ss:$-60 sm:$0x30] %vm108, %v107
  %v115 = vld.sshfl [vmem:[%s0] sm:$0xff pattern:$0x44425031]
  %116 = vrot.lane.b32.xlu0 %v115, 116
  %v117 = vpop.permute.xlu0 %116
  %vm118 = vcmask 7168
  %s119 = scalar_lea.vmem %s1, 32
  %120 = vst.msk [vmem:[%s119] ss:$40 sm:$0x3] %vm118, %v117
  %s121 = scalar_lea.vmem %s1, 4294967108
  %122 = vst.msk [vmem:[%s121] ss:$100 sm:$0xc] %vm118, %v117
  %s123 = scalar_lea.vmem %s1, 4294967188
  %124 = vst.msk [vmem:[%s123] ss:$40 sm:$0x30] %vm118, %v117
  %v125 = vld.sshfl [vmem:[%s0] sm:$0xff pattern:$0x44425031]
  %126 = vrot.lane.b32.xlu0 %v125, 115
  %v127 = vpop.permute.xlu0 %126
  %vm128 = vcmask 7168
  %s129 = scalar_lea.vmem %s1, 33
  %130 = vst.msk [vmem:[%s129] ss:$40 sm:$0x3] %vm128, %v127
  %s131 = scalar_lea.vmem %s1, 4294967109
  %132 = vst.msk [vmem:[%s131] ss:$100 sm:$0xc] %vm128, %v127
  %s133 = scalar_lea.vmem %s1, 4294967189
  %134 = vst.msk [vmem:[%s133] ss:$40 sm:$0x30] %vm128, %v127
  %v135 = vld.sshfl [vmem:[%s0] sm:$0xff pattern:$0x44425031]
  %136 = vrot.lane.b32.xlu0 %v135, 114
  %v137 = vpop.permute.xlu0 %136
  %vm138 = vcmask 7168
  %s139 = scalar_lea.vmem %s1, 34
  %140 = vst.msk [vmem:[%s139] ss:$40 sm:$0x3] %vm138, %v137
  %s141 = scalar_lea.vmem %s1, 4294967110
  %142 = vst.msk [vmem:[%s141] ss:$100 sm:$0xc] %vm138, %v137
  %s143 = scalar_lea.vmem %s1, 4294967190
  %144 = vst.msk [vmem:[%s143] ss:$40 sm:$0x30] %vm138, %v137
  %v145 = vld.sshfl [vmem:[%s0] sm:$0xff pattern:$0x44425031]
  %146 = vrot.lane.b32.xlu0 %v145, 113
  %v147 = vpop.permute.xlu0 %146
  %vm148 = vcmask 7168
  %s149 = scalar_lea.vmem %s1, 35
  %150 = vst.msk [vmem:[%s149] ss:$40 sm:$0x3] %vm148, %v147
  %s151 = scalar_lea.vmem %s1, 4294967111
  %152 = vst.msk [vmem:[%s151] ss:$100 sm:$0xc] %vm148, %v147
  %s153 = scalar_lea.vmem %s1, 4294967191
  %154 = vst.msk [vmem:[%s153] ss:$40 sm:$0x30] %vm148, %v147
  %v155 = vld.sshfl [vmem:[%s0] sm:$0xff pattern:$0x22250314]
  %156 = vrot.lane.b32.xlu0 %v155, 112
  %v157 = vpop.permute.xlu0 %156
  %vm158 = vcmask 7168
  %s159 = scalar_lea.vmem %s1, 96
  %160 = vst.msk [vmem:[%s159] ss:$-60 sm:$0x3] %vm158, %v157
  %s161 = scalar_lea.vmem %s1, 196
  %162 = vst.msk [vmem:[%s161] ss:$-60 sm:$0xc] %vm158, %v157
  %s163 = scalar_lea.vmem %s1, 356
  %164 = vst.msk [vmem:[%s163] ss:$-60 sm:$0x30] %vm158, %v157
  %v165 = vld.sshfl [vmem:[%s0] sm:$0xff pattern:$0x22250314]
  %166 = vrot.lane.b32.xlu0 %v165, 111
  %v167 = vpop.permute.xlu0 %166
  %vm168 = vcmask 7168
  %s169 = scalar_lea.vmem %s1, 97
  %170 = vst.msk [vmem:[%s169] ss:$-60 sm:$0x3] %vm168, %v167
  %s171 = scalar_lea.vmem %s1, 197
  %172 = vst.msk [vmem:[%s171] ss:$-60 sm:$0xc] %vm168, %v167
  %s173 = scalar_lea.vmem %s1, 357
  %174 = vst.msk [vmem:[%s173] ss:$-60 sm:$0x30] %vm168, %v167
  %v175 = vld.sshfl [vmem:[%s0] sm:$0xff pattern:$0x22250314]
  %176 = vrot.lane.b32.xlu0 %v175, 110
  %v177 = vpop.permute.xlu0 %176
  %vm178 = vcmask 7168
  %s179 = scalar_lea.vmem %s1, 98
  %180 = vst.msk [vmem:[%s179] ss:$-60 sm:$0x3] %vm178, %v177
  %s181 = scalar_lea.vmem %s1, 198
  %182 = vst.msk [vmem:[%s181] ss:$-60 sm:$0xc] %vm178, %v177
  %s183 = scalar_lea.vmem %s1, 358
  %184 = vst.msk [vmem:[%s183] ss:$-60 sm:$0x30] %vm178, %v177
  %v185 = vld.sshfl [vmem:[%s0] sm:$0xff pattern:$0x22250314]
  %186 = vrot.lane.b32.xlu0 %v185, 109
  %v187 = vpop.permute.xlu0 %186
  %vm188 = vcmask 7168
  %s189 = scalar_lea.vmem %s1, 99
  %190 = vst.msk [vmem:[%s189] ss:$-60 sm:$0x3] %vm188, %v187
  %s191 = scalar_lea.vmem %s1, 199
  %192 = vst.msk [vmem:[%s191] ss:$-60 sm:$0xc] %vm188, %v187
  %s193 = scalar_lea.vmem %s1, 359
  %194 = vst.msk [vmem:[%s193] ss:$-60 sm:$0x30] %vm188, %v187

// kernel: tile.57
$region0: #{tile.57}
  #allocation0 [shape = 's32[1]{0}', space=sflag, size = 0x4, scoped, tag = 'scoped memory for tile.57']
  %s0 = inlined_call_operand.<no memory space> [shape: f32[], index: 0, kind: input, shape index: {}]
  %s1 = inlined_call_operand.vmem [shape: f32[6,1], index: 1, kind: output, shape index: {}]
  %v2 = vstv %s0
  %3 = vst [vmem:[%s1] sm:$0xff] %v2

// kernel: actor_forward.1
$region0: #{actor_forward.1}
  #allocation0 [shape = 'u32[]', space=smem, size = 0x4, offset = 0x4, fixed_abs, tag = 'smem constant byte address 0x4 - core index']
  #allocation1 [shape = 'u32[144,128]{1,0:T(1,128)}', space=vmem, size = 0x12000, scoped, tag = 'internal scratch']
  %s0 = inlined_call_operand.vmem [shape: bf16[30,128], index: 0, kind: input, shape index: {}]
  %s1 = inlined_call_operand.vmem [shape: bf16[120,30], index: 1, kind: input, shape index: {}]
  %s2 = inlined_call_operand.vmem [shape: f32[120,1], index: 2, kind: input, shape index: {}]
  %s3 = inlined_call_operand.vmem [shape: bf16[4,120,120], index: 3, kind: input, shape index: {}]
  %s4 = inlined_call_operand.vmem [shape: f32[4,120,1], index: 4, kind: input, shape index: {}]
  %s5 = inlined_call_operand.vmem [shape: bf16[6,120], index: 5, kind: input, shape index: {}]
  %s6 = inlined_call_operand.vmem [shape: f32[6,1], index: 6, kind: input, shape index: {}]
  %s7 = inlined_call_operand.vmem [shape: f32[6,128], index: 7, kind: output, shape index: {}]
  %s8 = sld [smem:[#allocation0]]
  $region38: #{actor_forward.1} parent=0
    _
  %s10 = ssub.s32 1, %s8
  %s11 = scalar_select 0, %s10, %s8
  // Predicated region
  $region2: #{actor_forward.1} parent=0 // pred_check
    _
  $region3: #{actor_forward.1} parent=0 // pred_check_branch
    %13 = sbr.rel (0) target = $region5
  $region4: #{actor_forward.1} parent=0 // pred_region
    _
  $region5: #{actor_forward.1} parent=0 // pred_fallthru
    _
  // Predicated region
  $region6: #{actor_forward.1} parent=0 // pred_check
    _
  $region7: #{actor_forward.1} parent=0 // pred_check_branch
    %15 = sbr.rel (0) target = $region9
  $region8: #{actor_forward.1} parent=0 // pred_region
    _
  $region9: #{actor_forward.1} parent=0 // pred_fallthru
    _
  // Predicated region
  $region10: #{actor_forward.1} parent=0 // pred_check
    _
  $region11: #{actor_forward.1} parent=0 // pred_check_branch
    %17 = sbr.rel (0) target = $region13
  $region12: #{actor_forward.1} parent=0 // pred_region
    _
  $region13: #{actor_forward.1} parent=0 // pred_fallthru
    _
  // Predicated region
  $region14: #{actor_forward.1} parent=0 // pred_check
    _
  $region15: #{actor_forward.1} parent=0 // pred_check_branch
    %19 = sbr.rel (0) target = $region17
  $region16: #{actor_forward.1} parent=0 // pred_region
    _
  $region17: #{actor_forward.1} parent=0 // pred_fallthru
    _
  // Predicated region
  $region18: #{actor_forward.1} parent=0 // pred_check
    _
  $region19: #{actor_forward.1} parent=0 // pred_check_branch
    %21 = sbr.rel (0) target = $region21
  $region20: #{actor_forward.1} parent=0 // pred_region
    _
  $region21: #{actor_forward.1} parent=0 // pred_fallthru
    _
  // Predicated region
  $region22: #{actor_forward.1} parent=0 // pred_check
    _
  $region23: #{actor_forward.1} parent=0 // pred_check_branch
    %23 = sbr.rel (0) target = $region25
  $region24: #{actor_forward.1} parent=0 // pred_region
    _
  $region25: #{actor_forward.1} parent=0 // pred_fallthru
    _
  // Predicated region
  $region26: #{actor_forward.1} parent=0 // pred_check
    _
  $region27: #{actor_forward.1} parent=0 // pred_check_branch
    %25 = sbr.rel (0) target = $region29
  $region28: #{actor_forward.1} parent=0 // pred_region
    _
  $region29: #{actor_forward.1} parent=0 // pred_fallthru
    _
  %v27 = vld [vmem:[%s0] sm:$0xf]
  %v28 = vld [vmem:[%s0 + $0x4] sm:$0xf]
  %v29 = vld [vmem:[%s0 + $0x8] sm:$0xf]
  %v30 = vld [vmem:[%s0 + $0xc] sm:$0x7]
  %v31 = vld [vmem:[%s1] sm:$0xf]
  %v32 = vld [vmem:[%s1 + $0x4] sm:$0xf]
  %v33 = vld [vmem:[%s1 + $0x8] sm:$0xf]
  %v34 = vld [vmem:[%s1 + $0xc] sm:$0xf]
  %v35 = vld [vmem:[%s1 + $0x10] sm:$0xf]
  %v36 = vld [vmem:[%s1 + $0x14] sm:$0xf]
  %v37 = vld [vmem:[%s1 + $0x18] sm:$0xf]
  %v38 = vld [vmem:[%s1 + $0x1c] sm:$0xf]
  %v39 = vld [vmem:[%s1 + $0x20] sm:$0xf]
  %v40 = vld [vmem:[%s1 + $0x24] sm:$0xf]
  %v41 = vld [vmem:[%s1 + $0x28] sm:$0xf]
  %v42 = vld [vmem:[%s1 + $0x2c] sm:$0xf]
  %v43 = vld [vmem:[%s1 + $0x30] sm:$0xf]
  %v44 = vld [vmem:[%s1 + $0x34] sm:$0xf]
  %v45 = vld [vmem:[%s1 + $0x38] sm:$0xf]
  %v46 = vld [vmem:[%s2] sm:$0xff]
  %v47 = vld [vmem:[%s2 + $0x8] sm:$0xff]
  %v48 = vld [vmem:[%s2 + $0x10] sm:$0xff]
  %v49 = vld [vmem:[%s2 + $0x18] sm:$0xff]
  %v50 = vld [vmem:[%s2 + $0x20] sm:$0xff]
  %v51 = vld [vmem:[%s2 + $0x28] sm:$0xff]
  %v52 = vld [vmem:[%s2 + $0x30] sm:$0xff]
  %v53 = vld [vmem:[%s2 + $0x38] sm:$0xff]
  %v54 = vld [vmem:[%s2 + $0x40] sm:$0xff]
  %v55 = vld [vmem:[%s2 + $0x48] sm:$0xff]
  %v56 = vld [vmem:[%s2 + $0x50] sm:$0xff]
  %v57 = vld [vmem:[%s2 + $0x58] sm:$0xff]
  %v58 = vld [vmem:[%s2 + $0x60] sm:$0xff]
  %v59 = vld [vmem:[%s2 + $0x68] sm:$0xff]
  %v60 = vld [vmem:[%s2 + $0x70] sm:$0xff]
  %62 = vset.pattern.permute.xlu0 0
  %63 = vperm.xlu0 %62, %v46
  %v64 = vpop.permute.xlu0 %63
  %67 = vset.pattern.permute.xlu0 0
  %68 = vperm.xlu0 %67, %v47
  %v69 = vpop.permute.xlu0 %68
  %72 = vset.pattern.permute.xlu0 0
  %73 = vperm.xlu0 %72, %v48
  %v74 = vpop.permute.xlu0 %73
  %77 = vset.pattern.permute.xlu0 0
  %78 = vperm.xlu0 %77, %v49
  %v79 = vpop.permute.xlu0 %78
  %82 = vset.pattern.permute.xlu0 0
  %83 = vperm.xlu0 %82, %v50
  %v84 = vpop.permute.xlu0 %83
  %87 = vset.pattern.permute.xlu0 0
  %88 = vperm.xlu0 %87, %v51
  %v89 = vpop.permute.xlu0 %88
  %92 = vset.pattern.permute.xlu0 0
  %93 = vperm.xlu0 %92, %v52
  %v94 = vpop.permute.xlu0 %93
  %97 = vset.pattern.permute.xlu0 0
  %98 = vperm.xlu0 %97, %v53
  %v99 = vpop.permute.xlu0 %98
  %102 = vset.pattern.permute.xlu0 0
  %103 = vperm.xlu0 %102, %v54
  %v104 = vpop.permute.xlu0 %103
  %107 = vset.pattern.permute.xlu0 0
  %108 = vperm.xlu0 %107, %v55
  %v109 = vpop.permute.xlu0 %108
  %112 = vset.pattern.permute.xlu0 0
  %113 = vperm.xlu0 %112, %v56
  %v114 = vpop.permute.xlu0 %113
  %117 = vset.pattern.permute.xlu0 0
  %118 = vperm.xlu0 %117, %v57
  %v119 = vpop.permute.xlu0 %118
  %122 = vset.pattern.permute.xlu0 0
  %123 = vperm.xlu0 %122, %v58
  %v124 = vpop.permute.xlu0 %123
  %127 = vset.pattern.permute.xlu0 0
  %128 = vperm.xlu0 %127, %v59
  %v129 = vpop.permute.xlu0 %128
  %132 = vset.pattern.permute.xlu0 0
  %133 = vperm.xlu0 %132, %v60
  %v134 = vpop.permute.xlu0 %133
  %v151 = vunpack.c.l.b16 %v31
  %v152 = vunpack.c.l.b16 %v32
  %v153 = vunpack.c.l.b16 %v33
  %v154 = vunpack.c.l.b16 %v34
  %v155 = vunpack.c.l.b16 %v35
  %v156 = vunpack.c.l.b16 %v36
  %v157 = vunpack.c.l.b16 %v37
  %v158 = vunpack.c.l.b16 %v38
  %v159 = vunpack.c.l.b16 %v39
  %v160 = vunpack.c.l.b16 %v40
  %v161 = vunpack.c.l.b16 %v41
  %v162 = vunpack.c.l.b16 %v42
  %v163 = vunpack.c.l.b16 %v43
  %v164 = vunpack.c.l.b16 %v44
  %v165 = vunpack.c.l.b16 %v45
  %v166 = vpack.c.b16 %v152, %v151
  %v167 = vpack.c.b16 %v154, %v153
  %v168 = vpack.c.b16 %v156, %v155
  %v169 = vpack.c.b16 %v158, %v157
  %v170 = vpack.c.b16 %v160, %v159
  %v171 = vpack.c.b16 %v162, %v161
  %v172 = vpack.c.b16 %v164, %v163
  %v173 = vpack.c.b16 %v165, %v165
  %v178 = vunpack.c.l.b16 %v27
  %v179 = vunpack.c.l.b16 %v28
  %v180 = vunpack.c.l.b16 %v29
  %v181 = vunpack.c.l.b16 %v30
  %v182 = vpack.c.b16 %v179, %v178
  %v183 = vpack.c.b16 %v181, %v180
  %vm185 = vcmask 244736
  %v187 = vsel %vm185, %v166, 0
  %v190 = vsel %vm185, %v167, 0
  %v193 = vsel %vm185, %v168, 0
  %v196 = vsel %vm185, %v169, 0
  %v199 = vsel %vm185, %v170, 0
  %v202 = vsel %vm185, %v171, 0
  %v205 = vsel %vm185, %v172, 0
  %v208 = vsel %vm185, %v173, 0
  %vm210 = vcmask 1046528
  %v212 = vsel %vm210, %v183, 0
  %214 = vmatprep.subr.bf16.mxu0 0
  %215 = vmatpush1.bf16.msra.mxu0 %v182
  %216 = vmatprep.subr.bf16.mxu0 0
  %217 = vmatpush1.bf16.msra.mxu0 %v212
  %218 = vmatprep.subr.bf16.mxu0 0
  %219 = vmatpush1.bf16.msra.mxu0 0
  %220 = vmatprep.subr.bf16.mxu0 0
  %221 = vmatpush1.bf16.msra.mxu0 0
  %222 = vmatprep.subr.bf16.mxu0 0
  %223 = vmatpush1.bf16.msra.mxu0 0
  %224 = vmatprep.subr.bf16.mxu0 0
  %225 = vmatpush1.bf16.msra.mxu0 0
  %226 = vmatprep.subr.bf16.mxu0 0
  %227 = vmatpush1.bf16.msra.mxu0 0
  %228 = vmatprep.subr.bf16.mxu0 0
  %229 = vmatpush1.bf16.msra.mxu0 0
  %230 = vmatprep.subr.bf16.mxu0 0
  %231 = vmatpush1.bf16.msra.mxu0 0
  %232 = vmatprep.subr.bf16.mxu0 0
  %233 = vmatpush1.bf16.msra.mxu0 0
  %234 = vmatprep.subr.bf16.mxu0 0
  %235 = vmatpush1.bf16.msra.mxu0 0
  %236 = vmatprep.subr.bf16.mxu0 0
  %237 = vmatpush1.bf16.msra.mxu0 0
  %238 = vmatprep.subr.bf16.mxu0 0
  %239 = vmatpush1.bf16.msra.mxu0 0
  %240 = vmatprep.subr.bf16.mxu0 0
  %241 = vmatpush1.bf16.msra.mxu0 0
  %242 = vmatprep.subr.bf16.mxu0 0
  %243 = vmatpush1.bf16.msra.mxu0 0
  %244 = vmatprep.subr.bf16.mxu0 0
  %245 = vmatpush1.bf16.msra.mxu0 0
  %246 = vmatprep.mubr.bf16.mxu0 0
  %247 = vmatmul.mubr.bf16.gmra.mrb[0].mxu0 %v187
  %v248 = vpop.f32.mrb[0].mxu0
  %v249 = vadd.f32 %v64, %v248
  %v250 = vpop.f32.mrb[0].mxu0
  %v251 = vpop.f32.mrb[0].mxu0
  %v252 = vadd.f32 %v69, %v251
  %v253 = vpop.f32.mrb[0].mxu0
  %254 = vmatprep.mubr.bf16.mxu0 0
  %255 = vmatmul.mubr.bf16.gmra.mrb[0].mxu0 %v190
  %v256 = vpop.f32.mrb[0].mxu0
  %v257 = vadd.f32 %v74, %v256
  %v258 = vpop.f32.mrb[0].mxu0
  %v259 = vpop.f32.mrb[0].mxu0
  %v260 = vadd.f32 %v79, %v259
  %v261 = vpop.f32.mrb[0].mxu0
  %262 = vmatprep.mubr.bf16.mxu0 0
  %263 = vmatmul.mubr.bf16.gmra.mrb[0].mxu0 %v193
  %v264 = vpop.f32.mrb[0].mxu0
  %v265 = vadd.f32 %v84, %v264
  %v266 = vpop.f32.mrb[0].mxu0
  %v267 = vpop.f32.mrb[0].mxu0
  %v268 = vadd.f32 %v89, %v267
  %v269 = vpop.f32.mrb[0].mxu0
  %270 = vmatprep.mubr.bf16.mxu0 0
  %271 = vmatmul.mubr.bf16.gmra.mrb[0].mxu0 %v196
  %v272 = vpop.f32.mrb[0].mxu0
  %v273 = vadd.f32 %v94, %v272
  %v274 = vpop.f32.mrb[0].mxu0
  %v275 = vpop.f32.mrb[0].mxu0
  %v276 = vadd.f32 %v99, %v275
  %v277 = vpop.f32.mrb[0].mxu0
  %278 = vmatprep.mubr.bf16.mxu0 0
  %279 = vmatmul.mubr.bf16.gmra.mrb[0].mxu0 %v199
  %v280 = vpop.f32.mrb[0].mxu0
  %v281 = vadd.f32 %v104, %v280
  %v282 = vpop.f32.mrb[0].mxu0
  %v283 = vpop.f32.mrb[0].mxu0
  %v284 = vadd.f32 %v109, %v283
  %v285 = vpop.f32.mrb[0].mxu0
  %286 = vmatprep.mubr.bf16.mxu0 0
  %287 = vmatmul.mubr.bf16.gmra.mrb[0].mxu0 %v202
  %v288 = vpop.f32.mrb[0].mxu0
  %v289 = vadd.f32 %v114, %v288
  %v290 = vpop.f32.mrb[0].mxu0
  %v291 = vpop.f32.mrb[0].mxu0
  %v292 = vadd.f32 %v119, %v291
  %v293 = vpop.f32.mrb[0].mxu0
  %294 = vmatprep.mubr.bf16.mxu0 0
  %295 = vmatmul.mubr.bf16.gmra.mrb[0].mxu0 %v205
  %v296 = vpop.f32.mrb[0].mxu0
  %v297 = vadd.f32 %v124, %v296
  %v298 = vpop.f32.mrb[0].mxu0
  %v299 = vpop.f32.mrb[0].mxu0
  %v300 = vadd.f32 %v129, %v299
  %v301 = vpop.f32.mrb[0].mxu0
  %302 = vmatprep.mubr.bf16.mxu0 0
  %303 = vmatmul.mubr.bf16.gmra.mrb[0].mxu0 %v208
  %v304 = vpop.f32.mrb[0].mxu0
  %v305 = vadd.f32 %v134, %v304
  %v306 = vpop.f32.mrb[0].mxu0
  %v307 = vpop.f32.mrb[0].mxu0
  %v308 = vpop.f32.mrb[0].mxu0
  %309 = vdwg.mxu0
  %v310 = vmax.f32 %v249, 0.0
  %v311 = vmax.f32 %v252, 0.0
  %v312 = vmax.f32 %v257, 0.0
  %v313 = vmax.f32 %v260, 0.0
  %v314 = vmax.f32 %v265, 0.0
  %v315 = vmax.f32 %v268, 0.0
  %v316 = vmax.f32 %v273, 0.0
  %v317 = vmax.f32 %v276, 0.0
  %v318 = vmax.f32 %v281, 0.0
  %v319 = vmax.f32 %v284, 0.0
  %v320 = vmax.f32 %v289, 0.0
  %v321 = vmax.f32 %v292, 0.0
  %v322 = vmax.f32 %v297, 0.0
  %v323 = vmax.f32 %v300, 0.0
  %v324 = vmax.f32 %v305, 0.0
  %v325 = vpack.c.bf16 %v311, %v310
  %v326 = vpack.c.bf16 %v313, %v312
  %v327 = vpack.c.bf16 %v315, %v314
  %v328 = vpack.c.bf16 %v317, %v316
  %v329 = vpack.c.bf16 %v319, %v318
  %v330 = vpack.c.bf16 %v321, %v320
  %v331 = vpack.c.bf16 %v323, %v322
  %v332 = vpack.c.bf16 %v324, %v324
  %v333 = vld [vmem:[%s3] sm:$0xf]
  %v334 = vld [vmem:[%s3 + $0x4] sm:$0xf]
  %v335 = vld [vmem:[%s3 + $0x8] sm:$0xf]
  %v336 = vld [vmem:[%s3 + $0xc] sm:$0xf]
  %v337 = vld [vmem:[%s3 + $0x10] sm:$0xf]
  %v338 = vld [vmem:[%s3 + $0x14] sm:$0xf]
  %v339 = vld [vmem:[%s3 + $0x18] sm:$0xf]
  %v340 = vld [vmem:[%s3 + $0x1c] sm:$0xf]
  %v341 = vld [vmem:[%s3 + $0x20] sm:$0xf]
  %v342 = vld [vmem:[%s3 + $0x24] sm:$0xf]
  %v343 = vld [vmem:[%s3 + $0x28] sm:$0xf]
  %v344 = vld [vmem:[%s3 + $0x2c] sm:$0xf]
  %v345 = vld [vmem:[%s3 + $0x30] sm:$0xf]
  %v346 = vld [vmem:[%s3 + $0x34] sm:$0xf]
  %v347 = vld [vmem:[%s3 + $0x38] sm:$0xf]
  %v348 = vld [vmem:[%s4] sm:$0xff]
  %v349 = vld [vmem:[%s4 + $0x8] sm:$0xff]
  %v350 = vld [vmem:[%s4 + $0x10] sm:$0xff]
  %v351 = vld [vmem:[%s4 + $0x18] sm:$0xff]
  %v352 = vld [vmem:[%s4 + $0x20] sm:$0xff]
  %v353 = vld [vmem:[%s4 + $0x28] sm:$0xff]
  %v354 = vld [vmem:[%s4 + $0x30] sm:$0xff]
  %v355 = vld [vmem:[%s4 + $0x38] sm:$0xff]
  %v356 = vld [vmem:[%s4 + $0x40] sm:$0xff]
  %v357 = vld [vmem:[%s4 + $0x48] sm:$0xff]
  %v358 = vld [vmem:[%s4 + $0x50] sm:$0xff]
  %v359 = vld [vmem:[%s4 + $0x58] sm:$0xff]
  %v360 = vld [vmem:[%s4 + $0x60] sm:$0xff]
  %v361 = vld [vmem:[%s4 + $0x68] sm:$0xff]
  %v362 = vld [vmem:[%s4 + $0x70] sm:$0xff]
  %364 = vset.pattern.permute.xlu0 0
  %365 = vperm.xlu0 %364, %v348
  %v366 = vpop.permute.xlu0 %365
  %369 = vset.pattern.permute.xlu0 0
  %370 = vperm.xlu0 %369, %v349
  %v371 = vpop.permute.xlu0 %370
  %374 = vset.pattern.permute.xlu0 0
  %375 = vperm.xlu0 %374, %v350
  %v376 = vpop.permute.xlu0 %375
  %379 = vset.pattern.permute.xlu0 0
  %380 = vperm.xlu0 %379, %v351
  %v381 = vpop.permute.xlu0 %380
  %384 = vset.pattern.permute.xlu0 0
  %385 = vperm.xlu0 %384, %v352
  %v386 = vpop.permute.xlu0 %385
  %389 = vset.pattern.permute.xlu0 0
  %390 = vperm.xlu0 %389, %v353
  %v391 = vpop.permute.xlu0 %390
  %394 = vset.pattern.permute.xlu0 0
  %395 = vperm.xlu0 %394, %v354
  %v396 = vpop.permute.xlu0 %395
  %399 = vset.pattern.permute.xlu0 0
  %400 = vperm.xlu0 %399, %v355
  %v401 = vpop.permute.xlu0 %400
  %404 = vset.pattern.permute.xlu0 0
  %405 = vperm.xlu0 %404, %v356
  %v406 = vpop.permute.xlu0 %405
  %409 = vset.pattern.permute.xlu0 0
  %410 = vperm.xlu0 %409, %v357
  %v411 = vpop.permute.xlu0 %410
  %414 = vset.pattern.permute.xlu0 0
  %415 = vperm.xlu0 %414, %v358
  %v416 = vpop.permute.xlu0 %415
  %419 = vset.pattern.permute.xlu0 0
  %420 = vperm.xlu0 %419, %v359
  %v421 = vpop.permute.xlu0 %420
  %424 = vset.pattern.permute.xlu0 0
  %425 = vperm.xlu0 %424, %v360
  %v426 = vpop.permute.xlu0 %425
  %429 = vset.pattern.permute.xlu0 0
  %430 = vperm.xlu0 %429, %v361
  %v431 = vpop.permute.xlu0 %430
  %434 = vset.pattern.permute.xlu0 0
  %435 = vperm.xlu0 %434, %v362
  %v436 = vpop.permute.xlu0 %435
  %v453 = vunpack.c.l.b16 %v333
  %v454 = vunpack.c.l.b16 %v334
  %v455 = vunpack.c.l.b16 %v335
  %v456 = vunpack.c.l.b16 %v336
  %v457 = vunpack.c.l.b16 %v337
  %v458 = vunpack.c.l.b16 %v338
  %v459 = vunpack.c.l.b16 %v339
  %v460 = vunpack.c.l.b16 %v340
  %v461 = vunpack.c.l.b16 %v341
  %v462 = vunpack.c.l.b16 %v342
  %v463 = vunpack.c.l.b16 %v343
  %v464 = vunpack.c.l.b16 %v344
  %v465 = vunpack.c.l.b16 %v345
  %v466 = vunpack.c.l.b16 %v346
  %v467 = vunpack.c.l.b16 %v347
  %v468 = vpack.c.b16 %v454, %v453
  %v469 = vpack.c.b16 %v456, %v455
  %v470 = vpack.c.b16 %v458, %v457
  %v471 = vpack.c.b16 %v460, %v459
  %v472 = vpack.c.b16 %v462, %v461
  %v473 = vpack.c.b16 %v464, %v463
  %v474 = vpack.c.b16 %v466, %v465
  %v475 = vpack.c.b16 %v467, %v467
  %vm476 = vcmask 982016
  %v478 = vsel %vm476, %v468, 0
  %v481 = vsel %vm476, %v469, 0
  %v484 = vsel %vm476, %v470, 0
  %v487 = vsel %vm476, %v471, 0
  %v490 = vsel %vm476, %v472, 0
  %v493 = vsel %vm476, %v473, 0
  %v496 = vsel %vm476, %v474, 0
  %v499 = vsel %vm476, %v475, 0
  %vm501 = vcmask 1043456
  %v503 = vsel %vm501, %v332, 0
  %505 = vmatprep.subr.bf16.mxu0 0
  %506 = vmatpush1.bf16.msra.mxu0 %v325
  %507 = vmatprep.subr.bf16.mxu0 0
  %508 = vmatpush1.bf16.msra.mxu0 %v326
  %509 = vmatprep.subr.bf16.mxu0 0
  %510 = vmatpush1.bf16.msra.mxu0 %v327
  %511 = vmatprep.subr.bf16.mxu0 0
  %512 = vmatpush1.bf16.msra.mxu0 %v328
  %513 = vmatprep.subr.bf16.mxu0 0
  %514 = vmatpush1.bf16.msra.mxu0 %v329
  %515 = vmatprep.subr.bf16.mxu0 0
  %516 = vmatpush1.bf16.msra.mxu0 %v330
  %517 = vmatprep.subr.bf16.mxu0 0
  %518 = vmatpush1.bf16.msra.mxu0 %v331
  %519 = vmatprep.subr.bf16.mxu0 0
  %520 = vmatpush1.bf16.msra.mxu0 %v503
  %521 = vmatprep.subr.bf16.mxu0 0
  %522 = vmatpush1.bf16.msra.mxu0 0
  %523 = vmatprep.subr.bf16.mxu0 0
  %524 = vmatpush1.bf16.msra.mxu0 0
  %525 = vmatprep.subr.bf16.mxu0 0
  %526 = vmatpush1.bf16.msra.mxu0 0
  %527 = vmatprep.subr.bf16.mxu0 0
  %528 = vmatpush1.bf16.msra.mxu0 0
  %529 = vmatprep.subr.bf16.mxu0 0
  %530 = vmatpush1.bf16.msra.mxu0 0
  %531 = vmatprep.subr.bf16.mxu0 0
  %532 = vmatpush1.bf16.msra.mxu0 0
  %533 = vmatprep.subr.bf16.mxu0 0
  %534 = vmatpush1.bf16.msra.mxu0 0
  %535 = vmatprep.subr.bf16.mxu0 0
  %536 = vmatpush1.bf16.msra.mxu0 0
  %537 = vmatprep.mubr.bf16.mxu0 0
  %538 = vmatmul.mubr.bf16.gmra.mrb[0].mxu0 %v478
  %v539 = vpop.f32.mrb[0].mxu0
  %v540 = vadd.f32 %v366, %v539
  %v541 = vpop.f32.mrb[0].mxu0
  %v542 = vpop.f32.mrb[0].mxu0
  %v543 = vadd.f32 %v371, %v542
  %v544 = vpop.f32.mrb[0].mxu0
  %545 = vmatprep.mubr.bf16.mxu0 0
  %546 = vmatmul.mubr.bf16.gmra.mrb[0].mxu0 %v481
  %v547 = vpop.f32.mrb[0].mxu0
  %v548 = vadd.f32 %v376, %v547
  %v549 = vpop.f32.mrb[0].mxu0
  %v550 = vpop.f32.mrb[0].mxu0
  %v551 = vadd.f32 %v381, %v550
  %v552 = vpop.f32.mrb[0].mxu0
  %553 = vmatprep.mubr.bf16.mxu0 0
  %554 = vmatmul.mubr.bf16.gmra.mrb[0].mxu0 %v484
  %v555 = vpop.f32.mrb[0].mxu0
  %v556 = vadd.f32 %v386, %v555
  %v557 = vpop.f32.mrb[0].mxu0
  %v558 = vpop.f32.mrb[0].mxu0
  %v559 = vadd.f32 %v391, %v558
  %v560 = vpop.f32.mrb[0].mxu0
  %561 = vmatprep.mubr.bf16.mxu0 0
  %562 = vmatmul.mubr.bf16.gmra.mrb[0].mxu0 %v487
  %v563 = vpop.f32.mrb[0].mxu0
  %v564 = vadd.f32 %v396, %v563
  %v565 = vpop.f32.mrb[0].mxu0
  %v566 = vpop.f32.mrb[0].mxu0
  %v567 = vadd.f32 %v401, %v566
  %v568 = vpop.f32.mrb[0].mxu0
  %569 = vmatprep.mubr.bf16.mxu0 0
  %570 = vmatmul.mubr.bf16.gmra.mrb[0].mxu0 %v490
  %v571 = vpop.f32.mrb[0].mxu0
  %v572 = vadd.f32 %v406, %v571
  %v573 = vpop.f32.mrb[0].mxu0
  %v574 = vpop.f32.mrb[0].mxu0
  %v575 = vadd.f32 %v411, %v574
  %v576 = vpop.f32.mrb[0].mxu0
  %577 = vmatprep.mubr.bf16.mxu0 0
  %578 = vmatmul.mubr.bf16.gmra.mrb[0].mxu0 %v493
  %v579 = vpop.f32.mrb[0].mxu0
  %v580 = vadd.f32 %v416, %v579
  %v581 = vpop.f32.mrb[0].mxu0
  %v582 = vpop.f32.mrb[0].mxu0
  %v583 = vadd.f32 %v421, %v582
  %v584 = vpop.f32.mrb[0].mxu0
  %585 = vmatprep.mubr.bf16.mxu0 0
  %586 = vmatmul.mubr.bf16.gmra.mrb[0].mxu0 %v496
  %v587 = vpop.f32.mrb[0].mxu0
  %v588 = vadd.f32 %v426, %v587
  %v589 = vpop.f32.mrb[0].mxu0
  %v590 = vpop.f32.mrb[0].mxu0
  %v591 = vadd.f32 %v431, %v590
  %v592 = vpop.f32.mrb[0].mxu0
  %593 = vmatprep.mubr.bf16.mxu0 0
  %594 = vmatmul.mubr.bf16.gmra.mrb[0].mxu0 %v499
  %v595 = vpop.f32.mrb[0].mxu0
  %v596 = vadd.f32 %v436, %v595
  %v597 = vpop.f32.mrb[0].mxu0
  %v598 = vpop.f32.mrb[0].mxu0
  %v599 = vpop.f32.mrb[0].mxu0
  %600 = vdwg.mxu0
  %v601 = vmax.f32 %v540, 0.0
  %v602 = vmax.f32 %v543, 0.0
  %v603 = vmax.f32 %v548, 0.0
  %v604 = vmax.f32 %v551, 0.0
  %v605 = vmax.f32 %v556, 0.0
  %v606 = vmax.f32 %v559, 0.0
  %v607 = vmax.f32 %v564, 0.0
  %v608 = vmax.f32 %v567, 0.0
  %v609 = vmax.f32 %v572, 0.0
  %v610 = vmax.f32 %v575, 0.0
  %v611 = vmax.f32 %v580, 0.0
  %v612 = vmax.f32 %v583, 0.0
  %v613 = vmax.f32 %v588, 0.0
  %v614 = vmax.f32 %v591, 0.0
  %v615 = vmax.f32 %v596, 0.0
  %v616 = vpack.c.bf16 %v602, %v601
  %v617 = vpack.c.bf16 %v604, %v603
  %v618 = vpack.c.bf16 %v606, %v605
  %v619 = vpack.c.bf16 %v608, %v607
  %v620 = vpack.c.bf16 %v610, %v609
  %v621 = vpack.c.bf16 %v612, %v611
  %v622 = vpack.c.bf16 %v614, %v613
  %v623 = vpack.c.bf16 %v615, %v615
  %s624 = scalar_lea.vmem %s3, 60
  %v625 = vld [vmem:[%s624] sm:$0xf]
  %v626 = vld [vmem:[%s624 + $0x4] sm:$0xf]
  %v627 = vld [vmem:[%s624 + $0x8] sm:$0xf]
  %v628 = vld [vmem:[%s624 + $0xc] sm:$0xf]
  %v629 = vld [vmem:[%s624 + $0x10] sm:$0xf]
  %v630 = vld [vmem:[%s624 + $0x14] sm:$0xf]
  %v631 = vld [vmem:[%s624 + $0x18] sm:$0xf]
  %v632 = vld [vmem:[%s624 + $0x1c] sm:$0xf]
  %v633 = vld [vmem:[%s624 + $0x20] sm:$0xf]
  %v634 = vld [vmem:[%s624 + $0x24] sm:$0xf]
  %v635 = vld [vmem:[%s624 + $0x28] sm:$0xf]
  %v636 = vld [vmem:[%s624 + $0x2c] sm:$0xf]
  %v637 = vld [vmem:[%s624 + $0x30] sm:$0xf]
  %v638 = vld [vmem:[%s624 + $0x34] sm:$0xf]
  %v639 = vld [vmem:[%s624 + $0x38] sm:$0xf]
  %s640 = scalar_lea.vmem %s4, 120
  %v641 = vld [vmem:[%s640] sm:$0xff]
  %v642 = vld [vmem:[%s640 + $0x8] sm:$0xff]
  %v643 = vld [vmem:[%s640 + $0x10] sm:$0xff]
  %v644 = vld [vmem:[%s640 + $0x18] sm:$0xff]
  %v645 = vld [vmem:[%s640 + $0x20] sm:$0xff]
  %v646 = vld [vmem:[%s640 + $0x28] sm:$0xff]
  %v647 = vld [vmem:[%s640 + $0x30] sm:$0xff]
  %v648 = vld [vmem:[%s640 + $0x38] sm:$0xff]
  %v649 = vld [vmem:[%s640 + $0x40] sm:$0xff]
  %v650 = vld [vmem:[%s640 + $0x48] sm:$0xff]
  %v651 = vld [vmem:[%s640 + $0x50] sm:$0xff]
  %v652 = vld [vmem:[%s640 + $0x58] sm:$0xff]
  %v653 = vld [vmem:[%s640 + $0x60] sm:$0xff]
  %v654 = vld [vmem:[%s640 + $0x68] sm:$0xff]
  %v655 = vld [vmem:[%s640 + $0x70] sm:$0xff]
  %657 = vset.pattern.permute.xlu0 0
  %658 = vperm.xlu0 %657, %v641
  %v659 = vpop.permute.xlu0 %658
  %662 = vset.pattern.permute.xlu0 0
  %663 = vperm.xlu0 %662, %v642
  %v664 = vpop.permute.xlu0 %663
  %667 = vset.pattern.permute.xlu0 0
  %668 = vperm.xlu0 %667, %v643
  %v669 = vpop.permute.xlu0 %668
  %672 = vset.pattern.permute.xlu0 0
  %673 = vperm.xlu0 %672, %v644
  %v674 = vpop.permute.xlu0 %673
  %677 = vset.pattern.permute.xlu0 0
  %678 = vperm.xlu0 %677, %v645
  %v679 = vpop.permute.xlu0 %678
  %682 = vset.pattern.permute.xlu0 0
  %683 = vperm.xlu0 %682, %v646
  %v684 = vpop.permute.xlu0 %683
  %687 = vset.pattern.permute.xlu0 0
  %688 = vperm.xlu0 %687, %v647
  %v689 = vpop.permute.xlu0 %688
  %692 = vset.pattern.permute.xlu0 0
  %693 = vperm.xlu0 %692, %v648
  %v694 = vpop.permute.xlu0 %693
  %697 = vset.pattern.permute.xlu0 0
  %698 = vperm.xlu0 %697, %v649
  %v699 = vpop.permute.xlu0 %698
  %702 = vset.pattern.permute.xlu0 0
  %703 = vperm.xlu0 %702, %v650
  %v704 = vpop.permute.xlu0 %703
  %707 = vset.pattern.permute.xlu0 0
  %708 = vperm.xlu0 %707, %v651
  %v709 = vpop.permute.xlu0 %708
  %712 = vset.pattern.permute.xlu0 0
  %713 = vperm.xlu0 %712, %v652
  %v714 = vpop.permute.xlu0 %713
  %717 = vset.pattern.permute.xlu0 0
  %718 = vperm.xlu0 %717, %v653
  %v719 = vpop.permute.xlu0 %718
  %722 = vset.pattern.permute.xlu0 0
  %723 = vperm.xlu0 %722, %v654
  %v724 = vpop.permute.xlu0 %723
  %727 = vset.pattern.permute.xlu0 0
  %728 = vperm.xlu0 %727, %v655
  %v729 = vpop.permute.xlu0 %728
  %v746 = vunpack.c.l.b16 %v625
  %v747 = vunpack.c.l.b16 %v626
  %v748 = vunpack.c.l.b16 %v627
  %v749 = vunpack.c.l.b16 %v628
  %v750 = vunpack.c.l.b16 %v629
  %v751 = vunpack.c.l.b16 %v630
  %v752 = vunpack.c.l.b16 %v631
  %v753 = vunpack.c.l.b16 %v632
  %v754 = vunpack.c.l.b16 %v633
  %v755 = vunpack.c.l.b16 %v634
  %v756 = vunpack.c.l.b16 %v635
  %v757 = vunpack.c.l.b16 %v636
  %v758 = vunpack.c.l.b16 %v637
  %v759 = vunpack.c.l.b16 %v638
  %v760 = vunpack.c.l.b16 %v639
  %v761 = vpack.c.b16 %v747, %v746
  %v762 = vpack.c.b16 %v749, %v748
  %v763 = vpack.c.b16 %v751, %v750
  %v764 = vpack.c.b16 %v753, %v752
  %v765 = vpack.c.b16 %v755, %v754
  %v766 = vpack.c.b16 %v757, %v756
  %v767 = vpack.c.b16 %v759, %v758
  %v768 = vpack.c.b16 %v760, %v760
  %v770 = vsel %vm476, %v761, 0
  %v773 = vsel %vm476, %v762, 0
  %v776 = vsel %vm476, %v763, 0
  %v779 = vsel %vm476, %v764, 0
  %v782 = vsel %vm476, %v765, 0
  %v785 = vsel %vm476, %v766, 0
  %v788 = vsel %vm476, %v767, 0
  %v791 = vsel %vm476, %v768, 0
  %v794 = vsel %vm501, %v623, 0
  %796 = vmatprep.subr.bf16.mxu0 0
  %797 = vmatpush1.bf16.msra.mxu0 %v616
  %798 = vmatprep.subr.bf16.mxu0 0
  %799 = vmatpush1.bf16.msra.mxu0 %v617
  %800 = vmatprep.subr.bf16.mxu0 0
  %801 = vmatpush1.bf16.msra.mxu0 %v618
  %802 = vmatprep.subr.bf16.mxu0 0
  %803 = vmatpush1.bf16.msra.mxu0 %v619
  %804 = vmatprep.subr.bf16.mxu0 0
  %805 = vmatpush1.bf16.msra.mxu0 %v620
  %806 = vmatprep.subr.bf16.mxu0 0
  %807 = vmatpush1.bf16.msra.mxu0 %v621
  %808 = vmatprep.subr.bf16.mxu0 0
  %809 = vmatpush1.bf16.msra.mxu0 %v622
  %810 = vmatprep.subr.bf16.mxu0 0
  %811 = vmatpush1.bf16.msra.mxu0 %v794
  %812 = vmatprep.subr.bf16.mxu0 0
  %813 = vmatpush1.bf16.msra.mxu0 0
  %814 = vmatprep.subr.bf16.mxu0 0
  %815 = vmatpush1.bf16.msra.mxu0 0
  %816 = vmatprep.subr.bf16.mxu0 0
  %817 = vmatpush1.bf16.msra.mxu0 0
  %818 = vmatprep.subr.bf16.mxu0 0
  %819 = vmatpush1.bf16.msra.mxu0 0
  %820 = vmatprep.subr.bf16.mxu0 0
  %821 = vmatpush1.bf16.msra.mxu0 0
  %822 = vmatprep.subr.bf16.mxu0 0
  %823 = vmatpush1.bf16.msra.mxu0 0
  %824 = vmatprep.subr.bf16.mxu0 0
  %825 = vmatpush1.bf16.msra.mxu0 0
  %826 = vmatprep.subr.bf16.mxu0 0
  %827 = vmatpush1.bf16.msra.mxu0 0
  %828 = vmatprep.mubr.bf16.mxu0 0
  %829 = vmatmul.mubr.bf16.gmra.mrb[0].mxu0 %v770
  %v830 = vpop.f32.mrb[0].mxu0
  %v831 = vadd.f32 %v659, %v830
  %v832 = vpop.f32.mrb[0].mxu0
  %v833 = vpop.f32.mrb[0].mxu0
  %v834 = vadd.f32 %v664, %v833
  %v835 = vpop.f32.mrb[0].mxu0
  %836 = vmatprep.mubr.bf16.mxu0 0
  %837 = vmatmul.mubr.bf16.gmra.mrb[0].mxu0 %v773
  %v838 = vpop.f32.mrb[0].mxu0
  %v839 = vadd.f32 %v669, %v838
  %v840 = vpop.f32.mrb[0].mxu0
  %v841 = vpop.f32.mrb[0].mxu0
  %v842 = vadd.f32 %v674, %v841
  %v843 = vpop.f32.mrb[0].mxu0
  %844 = vmatprep.mubr.bf16.mxu0 0
  %845 = vmatmul.mubr.bf16.gmra.mrb[0].mxu0 %v776
  %v846 = vpop.f32.mrb[0].mxu0
  %v847 = vadd.f32 %v679, %v846
  %v848 = vpop.f32.mrb[0].mxu0
  %v849 = vpop.f32.mrb[0].mxu0
  %v850 = vadd.f32 %v684, %v849
  %v851 = vpop.f32.mrb[0].mxu0
  %852 = vmatprep.mubr.bf16.mxu0 0
  %853 = vmatmul.mubr.bf16.gmra.mrb[0].mxu0 %v779
  %v854 = vpop.f32.mrb[0].mxu0
  %v855 = vadd.f32 %v689, %v854
  %v856 = vpop.f32.mrb[0].mxu0
  %v857 = vpop.f32.mrb[0].mxu0
  %v858 = vadd.f32 %v694, %v857
  %v859 = vpop.f32.mrb[0].mxu0
  %860 = vmatprep.mubr.bf16.mxu0 0
  %861 = vmatmul.mubr.bf16.gmra.mrb[0].mxu0 %v782
  %v862 = vpop.f32.mrb[0].mxu0
  %v863 = vadd.f32 %v699, %v862
  %v864 = vpop.f32.mrb[0].mxu0
  %v865 = vpop.f32.mrb[0].mxu0
  %v866 = vadd.f32 %v704, %v865
  %v867 = vpop.f32.mrb[0].mxu0
  %868 = vmatprep.mubr.bf16.mxu0 0
  %869 = vmatmul.mubr.bf16.gmra.mrb[0].mxu0 %v785
  %v870 = vpop.f32.mrb[0].mxu0
  %v871 = vadd.f32 %v709, %v870
  %v872 = vpop.f32.mrb[0].mxu0
  %v873 = vpop.f32.mrb[0].mxu0
  %v874 = vadd.f32 %v714, %v873
  %v875 = vpop.f32.mrb[0].mxu0
  %876 = vmatprep.mubr.bf16.mxu0 0
  %877 = vmatmul.mubr.bf16.gmra.mrb[0].mxu0 %v788
  %v878 = vpop.f32.mrb[0].mxu0
  %v879 = vadd.f32 %v719, %v878
  %v880 = vpop.f32.mrb[0].mxu0
  %v881 = vpop.f32.mrb[0].mxu0
  %v882 = vadd.f32 %v724, %v881
  %v883 = vpop.f32.mrb[0].mxu0
  %884 = vmatprep.mubr.bf16.mxu0 0
  %885 = vmatmul.mubr.bf16.gmra.mrb[0].mxu0 %v791
  %v886 = vpop.f32.mrb[0].mxu0
  %v887 = vadd.f32 %v729, %v886
  %v888 = vpop.f32.mrb[0].mxu0
  %v889 = vpop.f32.mrb[0].mxu0
  %v890 = vpop.f32.mrb[0].mxu0
  %891 = vdwg.mxu0
  %v892 = vmax.f32 %v831, 0.0
  %v893 = vmax.f32 %v834, 0.0
  %v894 = vmax.f32 %v839, 0.0
  %v895 = vmax.f32 %v842, 0.0
  %v896 = vmax.f32 %v847, 0.0
  %v897 = vmax.f32 %v850, 0.0
  %v898 = vmax.f32 %v855, 0.0
  %v899 = vmax.f32 %v858, 0.0
  %v900 = vmax.f32 %v863, 0.0
  %v901 = vmax.f32 %v866, 0.0
  %v902 = vmax.f32 %v871, 0.0
  %v903 = vmax.f32 %v874, 0.0
  %v904 = vmax.f32 %v879, 0.0
  %v905 = vmax.f32 %v882, 0.0
  %v906 = vmax.f32 %v887, 0.0
  %v907 = vpack.c.bf16 %v893, %v892
  %v908 = vpack.c.bf16 %v895, %v894
  %v909 = vpack.c.bf16 %v897, %v896
  %v910 = vpack.c.bf16 %v899, %v898
  %v911 = vpack.c.bf16 %v901, %v900
  %v912 = vpack.c.bf16 %v903, %v902
  %v913 = vpack.c.bf16 %v905, %v904
  %v914 = vpack.c.bf16 %v906, %v906
  %s915 = scalar_lea.vmem %s3, 120
  %v916 = vld [vmem:[%s915] sm:$0xf]
  %v917 = vld [vmem:[%s915 + $0x4] sm:$0xf]
  %v918 = vld [vmem:[%s915 + $0x8] sm:$0xf]
  %v919 = vld [vmem:[%s915 + $0xc] sm:$0xf]
  %v920 = vld [vmem:[%s915 + $0x10] sm:$0xf]
  %v921 = vld [vmem:[%s915 + $0x14] sm:$0xf]
  %v922 = vld [vmem:[%s915 + $0x18] sm:$0xf]
  %v923 = vld [vmem:[%s915 + $0x1c] sm:$0xf]
  %v924 = vld [vmem:[%s915 + $0x20] sm:$0xf]
  %v925 = vld [vmem:[%s915 + $0x24] sm:$0xf]
  %v926 = vld [vmem:[%s915 + $0x28] sm:$0xf]
  %v927 = vld [vmem:[%s915 + $0x2c] sm:$0xf]
  %v928 = vld [vmem:[%s915 + $0x30] sm:$0xf]
  %v929 = vld [vmem:[%s915 + $0x34] sm:$0xf]
  %v930 = vld [vmem:[%s915 + $0x38] sm:$0xf]
  %s931 = scalar_lea.vmem %s4, 240
  %v932 = vld [vmem:[%s931] sm:$0xff]
  %v933 = vld [vmem:[%s931 + $0x8] sm:$0xff]
  %v934 = vld [vmem:[%s931 + $0x10] sm:$0xff]
  %v935 = vld [vmem:[%s931 + $0x18] sm:$0xff]
  %v936 = vld [vmem:[%s931 + $0x20] sm:$0xff]
  %v937 = vld [vmem:[%s931 + $0x28] sm:$0xff]
  %v938 = vld [vmem:[%s931 + $0x30] sm:$0xff]
  %v939 = vld [vmem:[%s931 + $0x38] sm:$0xff]
  %v940 = vld [vmem:[%s931 + $0x40] sm:$0xff]
  %v941 = vld [vmem:[%s931 + $0x48] sm:$0xff]
  %v942 = vld [vmem:[%s931 + $0x50] sm:$0xff]
  %v943 = vld [vmem:[%s931 + $0x58] sm:$0xff]
  %v944 = vld [vmem:[%s931 + $0x60] sm:$0xff]
  %v945 = vld [vmem:[%s931 + $0x68] sm:$0xff]
  %v946 = vld [vmem:[%s931 + $0x70] sm:$0xff]
  %948 = vset.pattern.permute.xlu0 0
  %949 = vperm.xlu0 %948, %v932
  %v950 = vpop.permute.xlu0 %949
  %953 = vset.pattern.permute.xlu0 0
  %954 = vperm.xlu0 %953, %v933
  %v955 = vpop.permute.xlu0 %954
  %958 = vset.pattern.permute.xlu0 0
  %959 = vperm.xlu0 %958, %v934
  %v960 = vpop.permute.xlu0 %959
  %963 = vset.pattern.permute.xlu0 0
  %964 = vperm.xlu0 %963, %v935
  %v965 = vpop.permute.xlu0 %964
  %968 = vset.pattern.permute.xlu0 0
  %969 = vperm.xlu0 %968, %v936
  %v970 = vpop.permute.xlu0 %969
  %973 = vset.pattern.permute.xlu0 0
  %974 = vperm.xlu0 %973, %v937
  %v975 = vpop.permute.xlu0 %974
  %978 = vset.pattern.permute.xlu0 0
  %979 = vperm.xlu0 %978, %v938
  %v980 = vpop.permute.xlu0 %979
  %983 = vset.pattern.permute.xlu0 0
  %984 = vperm.xlu0 %983, %v939
  %v985 = vpop.permute.xlu0 %984
  %988 = vset.pattern.permute.xlu0 0
  %989 = vperm.xlu0 %988, %v940
  %v990 = vpop.permute.xlu0 %989
  %993 = vset.pattern.permute.xlu0 0
  %994 = vperm.xlu0 %993, %v941
  %v995 = vpop.permute.xlu0 %994
  %998 = vset.pattern.permute.xlu0 0
  %999 = vperm.xlu0 %998, %v942
  %v1000 = vpop.permute.xlu0 %999
  %1003 = vset.pattern.permute.xlu0 0
  %1004 = vperm.xlu0 %1003, %v943
  %v1005 = vpop.permute.xlu0 %1004
  %1008 = vset.pattern.permute.xlu0 0
  %1009 = vperm.xlu0 %1008, %v944
  %v1010 = vpop.permute.xlu0 %1009
  %1013 = vset.pattern.permute.xlu0 0
  %1014 = vperm.xlu0 %1013, %v945
  %v1015 = vpop.permute.xlu0 %1014
  %1018 = vset.pattern.permute.xlu0 0
  %1019 = vperm.xlu0 %1018, %v946
  %v1020 = vpop.permute.xlu0 %1019
  %v1037 = vunpack.c.l.b16 %v916
  %v1038 = vunpack.c.l.b16 %v917
  %v1039 = vunpack.c.l.b16 %v918
  %v1040 = vunpack.c.l.b16 %v919
  %v1041 = vunpack.c.l.b16 %v920
  %v1042 = vunpack.c.l.b16 %v921
  %v1043 = vunpack.c.l.b16 %v922
  %v1044 = vunpack.c.l.b16 %v923
  %v1045 = vunpack.c.l.b16 %v924
  %v1046 = vunpack.c.l.b16 %v925
  %v1047 = vunpack.c.l.b16 %v926
  %v1048 = vunpack.c.l.b16 %v927
  %v1049 = vunpack.c.l.b16 %v928
  %v1050 = vunpack.c.l.b16 %v929
  %v1051 = vunpack.c.l.b16 %v930
  %v1052 = vpack.c.b16 %v1038, %v1037
  %v1053 = vpack.c.b16 %v1040, %v1039
  %v1054 = vpack.c.b16 %v1042, %v1041
  %v1055 = vpack.c.b16 %v1044, %v1043
  %v1056 = vpack.c.b16 %v1046, %v1045
  %v1057 = vpack.c.b16 %v1048, %v1047
  %v1058 = vpack.c.b16 %v1050, %v1049
  %v1059 = vpack.c.b16 %v1051, %v1051
  %v1061 = vsel %vm476, %v1052, 0
  %v1064 = vsel %vm476, %v1053, 0
  %v1067 = vsel %vm476, %v1054, 0
  %v1070 = vsel %vm476, %v1055, 0
  %v1073 = vsel %vm476, %v1056, 0
  %v1076 = vsel %vm476, %v1057, 0
  %v1079 = vsel %vm476, %v1058, 0
  %v1082 = vsel %vm476, %v1059, 0
  %v1085 = vsel %vm501, %v914, 0
  %1087 = vmatprep.subr.bf16.mxu0 0
  %1088 = vmatpush1.bf16.msra.mxu0 %v907
  %1089 = vmatprep.subr.bf16.mxu0 0
  %1090 = vmatpush1.bf16.msra.mxu0 %v908
  %1091 = vmatprep.subr.bf16.mxu0 0
  %1092 = vmatpush1.bf16.msra.mxu0 %v909
  %1093 = vmatprep.subr.bf16.mxu0 0
  %1094 = vmatpush1.bf16.msra.mxu0 %v910
  %1095 = vmatprep.subr.bf16.mxu0 0
  %1096 = vmatpush1.bf16.msra.mxu0 %v911
  %1097 = vmatprep.subr.bf16.mxu0 0
  %1098 = vmatpush1.bf16.msra.mxu0 %v912
  %1099 = vmatprep.subr.bf16.mxu0 0
  %1100 = vmatpush1.bf16.msra.mxu0 %v913
  %1101 = vmatprep.subr.bf16.mxu0 0
  %1102 = vmatpush1.bf16.msra.mxu0 %v1085
  %1103 = vmatprep.subr.bf16.mxu0 0
  %1104 = vmatpush1.bf16.msra.mxu0 0
  %1105 = vmatprep.subr.bf16.mxu0 0
  %1106 = vmatpush1.bf16.msra.mxu0 0
  %1107 = vmatprep.subr.bf16.mxu0 0
  %1108 = vmatpush1.bf16.msra.mxu0 0
  %1109 = vmatprep.subr.bf16.mxu0 0
  %1110 = vmatpush1.bf16.msra.mxu0 0
  %1111 = vmatprep.subr.bf16.mxu0 0
  %1112 = vmatpush1.bf16.msra.mxu0 0
  %1113 = vmatprep.subr.bf16.mxu0 0
  %1114 = vmatpush1.bf16.msra.mxu0 0
  %1115 = vmatprep.subr.bf16.mxu0 0
  %1116 = vmatpush1.bf16.msra.mxu0 0
  %1117 = vmatprep.subr.bf16.mxu0 0
  %1118 = vmatpush1.bf16.msra.mxu0 0
  %1119 = vmatprep.mubr.bf16.mxu0 0
  %1120 = vmatmul.mubr.bf16.gmra.mrb[0].mxu0 %v1061
  %v1121 = vpop.f32.mrb[0].mxu0
  %v1122 = vadd.f32 %v950, %v1121
  %v1123 = vpop.f32.mrb[0].mxu0
  %v1124 = vpop.f32.mrb[0].mxu0
  %v1125 = vadd.f32 %v955, %v1124
  %v1126 = vpop.f32.mrb[0].mxu0
  %1127 = vmatprep.mubr.bf16.mxu0 0
  %1128 = vmatmul.mubr.bf16.gmra.mrb[0].mxu0 %v1064
  %v1129 = vpop.f32.mrb[0].mxu0
  %v1130 = vadd.f32 %v960, %v1129
  %v1131 = vpop.f32.mrb[0].mxu0
  %v1132 = vpop.f32.mrb[0].mxu0
  %v1133 = vadd.f32 %v965, %v1132
  %v1134 = vpop.f32.mrb[0].mxu0
  %1135 = vmatprep.mubr.bf16.mxu0 0
  %1136 = vmatmul.mubr.bf16.gmra.mrb[0].mxu0 %v1067
  %v1137 = vpop.f32.mrb[0].mxu0
  %v1138 = vadd.f32 %v970, %v1137
  %v1139 = vpop.f32.mrb[0].mxu0
  %v1140 = vpop.f32.mrb[0].mxu0
  %v1141 = vadd.f32 %v975, %v1140
  %v1142 = vpop.f32.mrb[0].mxu0
  %1143 = vmatprep.mubr.bf16.mxu0 0
  %1144 = vmatmul.mubr.bf16.gmra.mrb[0].mxu0 %v1070
  %v1145 = vpop.f32.mrb[0].mxu0
  %v1146 = vadd.f32 %v980, %v1145
  %v1147 = vpop.f32.mrb[0].mxu0
  %v1148 = vpop.f32.mrb[0].mxu0
  %v1149 = vadd.f32 %v985, %v1148
  %v1150 = vpop.f32.mrb[0].mxu0
  %1151 = vmatprep.mubr.bf16.mxu0 0
  %1152 = vmatmul.mubr.bf16.gmra.mrb[0].mxu0 %v1073
  %v1153 = vpop.f32.mrb[0].mxu0
  %v1154 = vadd.f32 %v990, %v1153
  %v1155 = vpop.f32.mrb[0].mxu0
  %v1156 = vpop.f32.mrb[0].mxu0
  %v1157 = vadd.f32 %v995, %v1156
  %v1158 = vpop.f32.mrb[0].mxu0
  %1159 = vmatprep.mubr.bf16.mxu0 0
  %1160 = vmatmul.mubr.bf16.gmra.mrb[0].mxu0 %v1076
  %v1161 = vpop.f32.mrb[0].mxu0
  %v1162 = vadd.f32 %v1000, %v1161
  %v1163 = vpop.f32.mrb[0].mxu0
  %v1164 = vpop.f32.mrb[0].mxu0
  %v1165 = vadd.f32 %v1005, %v1164
  %v1166 = vpop.f32.mrb[0].mxu0
  %1167 = vmatprep.mubr.bf16.mxu0 0
  %1168 = vmatmul.mubr.bf16.gmra.mrb[0].mxu0 %v1079
  %v1169 = vpop.f32.mrb[0].mxu0
  %v1170 = vadd.f32 %v1010, %v1169
  %v1171 = vpop.f32.mrb[0].mxu0
  %v1172 = vpop.f32.mrb[0].mxu0
  %v1173 = vadd.f32 %v1015, %v1172
  %v1174 = vpop.f32.mrb[0].mxu0
  %1175 = vmatprep.mubr.bf16.mxu0 0
  %1176 = vmatmul.mubr.bf16.gmra.mrb[0].mxu0 %v1082
  %v1177 = vpop.f32.mrb[0].mxu0
  %v1178 = vadd.f32 %v1020, %v1177
  %v1179 = vpop.f32.mrb[0].mxu0
  %v1180 = vpop.f32.mrb[0].mxu0
  %v1181 = vpop.f32.mrb[0].mxu0
  %1182 = vdwg.mxu0
  %v1183 = vmax.f32 %v1122, 0.0
  %v1184 = vmax.f32 %v1125, 0.0
  %v1185 = vmax.f32 %v1130, 0.0
  %v1186 = vmax.f32 %v1133, 0.0
  %v1187 = vmax.f32 %v1138, 0.0
  %v1188 = vmax.f32 %v1141, 0.0
  %v1189 = vmax.f32 %v1146, 0.0
  %v1190 = vmax.f32 %v1149, 0.0
  %v1191 = vmax.f32 %v1154, 0.0
  %v1192 = vmax.f32 %v1157, 0.0
  %v1193 = vmax.f32 %v1162, 0.0
  %v1194 = vmax.f32 %v1165, 0.0
  %v1195 = vmax.f32 %v1170, 0.0
  %v1196 = vmax.f32 %v1173, 0.0
  %v1197 = vmax.f32 %v1178, 0.0
  %v1198 = vpack.c.bf16 %v1184, %v1183
  %v1199 = vpack.c.bf16 %v1186, %v1185
  %v1200 = vpack.c.bf16 %v1188, %v1187
  %v1201 = vpack.c.bf16 %v1190, %v1189
  %v1202 = vpack.c.bf16 %v1192, %v1191
  %v1203 = vpack.c.bf16 %v1194, %v1193
  %v1204 = vpack.c.bf16 %v1196, %v1195
  %v1205 = vpack.c.bf16 %v1197, %v1197
  %s1206 = scalar_lea.vmem %s3, 180
  %v1207 = vld [vmem:[%s1206] sm:$0xf]
  %v1208 = vld [vmem:[%s1206 + $0x4] sm:$0xf]
  %v1209 = vld [vmem:[%s1206 + $0x8] sm:$0xf]
  %v1210 = vld [vmem:[%s1206 + $0xc] sm:$0xf]
  %v1211 = vld [vmem:[%s1206 + $0x10] sm:$0xf]
  %v1212 = vld [vmem:[%s1206 + $0x14] sm:$0xf]
  %v1213 = vld [vmem:[%s1206 + $0x18] sm:$0xf]
  %v1214 = vld [vmem:[%s1206 + $0x1c] sm:$0xf]
  %v1215 = vld [vmem:[%s1206 + $0x20] sm:$0xf]
  %v1216 = vld [vmem:[%s1206 + $0x24] sm:$0xf]
  %v1217 = vld [vmem:[%s1206 + $0x28] sm:$0xf]
  %v1218 = vld [vmem:[%s1206 + $0x2c] sm:$0xf]
  %v1219 = vld [vmem:[%s1206 + $0x30] sm:$0xf]
  %v1220 = vld [vmem:[%s1206 + $0x34] sm:$0xf]
  %v1221 = vld [vmem:[%s1206 + $0x38] sm:$0xf]
  %s1222 = scalar_lea.vmem %s4, 360
  %v1223 = vld [vmem:[%s1222] sm:$0xff]
  %v1224 = vld [vmem:[%s1222 + $0x8] sm:$0xff]
  %v1225 = vld [vmem:[%s1222 + $0x10] sm:$0xff]
  %v1226 = vld [vmem:[%s1222 + $0x18] sm:$0xff]
  %v1227 = vld [vmem:[%s1222 + $0x20] sm:$0xff]
  %v1228 = vld [vmem:[%s1222 + $0x28] sm:$0xff]
  %v1229 = vld [vmem:[%s1222 + $0x30] sm:$0xff]
  %v1230 = vld [vmem:[%s1222 + $0x38] sm:$0xff]
  %v1231 = vld [vmem:[%s1222 + $0x40] sm:$0xff]
  %v1232 = vld [vmem:[%s1222 + $0x48] sm:$0xff]
  %v1233 = vld [vmem:[%s1222 + $0x50] sm:$0xff]
  %v1234 = vld [vmem:[%s1222 + $0x58] sm:$0xff]
  %v1235 = vld [vmem:[%s1222 + $0x60] sm:$0xff]
  %v1236 = vld [vmem:[%s1222 + $0x68] sm:$0xff]
  %v1237 = vld [vmem:[%s1222 + $0x70] sm:$0xff]
  %1239 = vset.pattern.permute.xlu0 0
  %1240 = vperm.xlu0 %1239, %v1223
  %v1241 = vpop.permute.xlu0 %1240
  %1244 = vset.pattern.permute.xlu0 0
  %1245 = vperm.xlu0 %1244, %v1224
  %v1246 = vpop.permute.xlu0 %1245
  %1249 = vset.pattern.permute.xlu0 0
  %1250 = vperm.xlu0 %1249, %v1225
  %v1251 = vpop.permute.xlu0 %1250
  %1254 = vset.pattern.permute.xlu0 0
  %1255 = vperm.xlu0 %1254, %v1226
  %v1256 = vpop.permute.xlu0 %1255
  %1259 = vset.pattern.permute.xlu0 0
  %1260 = vperm.xlu0 %1259, %v1227
  %v1261 = vpop.permute.xlu0 %1260
  %1264 = vset.pattern.permute.xlu0 0
  %1265 = vperm.xlu0 %1264, %v1228
  %v1266 = vpop.permute.xlu0 %1265
  %1269 = vset.pattern.permute.xlu0 0
  %1270 = vperm.xlu0 %1269, %v1229
  %v1271 = vpop.permute.xlu0 %1270
  %1274 = vset.pattern.permute.xlu0 0
  %1275 = vperm.xlu0 %1274, %v1230
  %v1276 = vpop.permute.xlu0 %1275
  %1279 = vset.pattern.permute.xlu0 0
  %1280 = vperm.xlu0 %1279, %v1231
  %v1281 = vpop.permute.xlu0 %1280
  %1284 = vset.pattern.permute.xlu0 0
  %1285 = vperm.xlu0 %1284, %v1232
  %v1286 = vpop.permute.xlu0 %1285
  %1289 = vset.pattern.permute.xlu0 0
  %1290 = vperm.xlu0 %1289, %v1233
  %v1291 = vpop.permute.xlu0 %1290
  %1294 = vset.pattern.permute.xlu0 0
  %1295 = vperm.xlu0 %1294, %v1234
  %v1296 = vpop.permute.xlu0 %1295
  %1299 = vset.pattern.permute.xlu0 0
  %1300 = vperm.xlu0 %1299, %v1235
  %v1301 = vpop.permute.xlu0 %1300
  %1304 = vset.pattern.permute.xlu0 0
  %1305 = vperm.xlu0 %1304, %v1236
  %v1306 = vpop.permute.xlu0 %1305
  %1309 = vset.pattern.permute.xlu0 0
  %1310 = vperm.xlu0 %1309, %v1237
  %v1311 = vpop.permute.xlu0 %1310
  %v1328 = vunpack.c.l.b16 %v1207
  %v1329 = vunpack.c.l.b16 %v1208
  %v1330 = vunpack.c.l.b16 %v1209
  %v1331 = vunpack.c.l.b16 %v1210
  %v1332 = vunpack.c.l.b16 %v1211
  %v1333 = vunpack.c.l.b16 %v1212
  %v1334 = vunpack.c.l.b16 %v1213
  %v1335 = vunpack.c.l.b16 %v1214
  %v1336 = vunpack.c.l.b16 %v1215
  %v1337 = vunpack.c.l.b16 %v1216
  %v1338 = vunpack.c.l.b16 %v1217
  %v1339 = vunpack.c.l.b16 %v1218
  %v1340 = vunpack.c.l.b16 %v1219
  %v1341 = vunpack.c.l.b16 %v1220
  %v1342 = vunpack.c.l.b16 %v1221
  %v1343 = vpack.c.b16 %v1329, %v1328
  %v1344 = vpack.c.b16 %v1331, %v1330
  %v1345 = vpack.c.b16 %v1333, %v1332
  %v1346 = vpack.c.b16 %v1335, %v1334
  %v1347 = vpack.c.b16 %v1337, %v1336
  %v1348 = vpack.c.b16 %v1339, %v1338
  %v1349 = vpack.c.b16 %v1341, %v1340
  %v1350 = vpack.c.b16 %v1342, %v1342
  %v1352 = vsel %vm476, %v1343, 0
  %v1355 = vsel %vm476, %v1344, 0
  %v1358 = vsel %vm476, %v1345, 0
  %v1361 = vsel %vm476, %v1346, 0
  %v1364 = vsel %vm476, %v1347, 0
  %v1367 = vsel %vm476, %v1348, 0
  %v1370 = vsel %vm476, %v1349, 0
  %v1373 = vsel %vm476, %v1350, 0
  %v1376 = vsel %vm501, %v1205, 0
  %1378 = vmatprep.subr.bf16.mxu0 0
  %1379 = vmatpush1.bf16.msra.mxu0 %v1198
  %1380 = vmatprep.subr.bf16.mxu0 0
  %1381 = vmatpush1.bf16.msra.mxu0 %v1199
  %1382 = vmatprep.subr.bf16.mxu0 0
  %1383 = vmatpush1.bf16.msra.mxu0 %v1200
  %1384 = vmatprep.subr.bf16.mxu0 0
  %1385 = vmatpush1.bf16.msra.mxu0 %v1201
  %1386 = vmatprep.subr.bf16.mxu0 0
  %1387 = vmatpush1.bf16.msra.mxu0 %v1202
  %1388 = vmatprep.subr.bf16.mxu0 0
  %1389 = vmatpush1.bf16.msra.mxu0 %v1203
  %1390 = vmatprep.subr.bf16.mxu0 0
  %1391 = vmatpush1.bf16.msra.mxu0 %v1204
  %1392 = vmatprep.subr.bf16.mxu0 0
  %1393 = vmatpush1.bf16.msra.mxu0 %v1376
  %1394 = vmatprep.subr.bf16.mxu0 0
  %1395 = vmatpush1.bf16.msra.mxu0 0
  %1396 = vmatprep.subr.bf16.mxu0 0
  %1397 = vmatpush1.bf16.msra.mxu0 0
  %1398 = vmatprep.subr.bf16.mxu0 0
  %1399 = vmatpush1.bf16.msra.mxu0 0
  %1400 = vmatprep.subr.bf16.mxu0 0
  %1401 = vmatpush1.bf16.msra.mxu0 0
  %1402 = vmatprep.subr.bf16.mxu0 0
  %1403 = vmatpush1.bf16.msra.mxu0 0
  %1404 = vmatprep.subr.bf16.mxu0 0
  %1405 = vmatpush1.bf16.msra.mxu0 0
  %1406 = vmatprep.subr.bf16.mxu0 0
  %1407 = vmatpush1.bf16.msra.mxu0 0
  %1408 = vmatprep.subr.bf16.mxu0 0
  %1409 = vmatpush1.bf16.msra.mxu0 0
  %1410 = vmatprep.mubr.bf16.mxu0 0
  %1411 = vmatmul.mubr.bf16.gmra.mrb[0].mxu0 %v1352
  %v1412 = vpop.f32.mrb[0].mxu0
  %v1413 = vadd.f32 %v1241, %v1412
  %v1414 = vpop.f32.mrb[0].mxu0
  %v1415 = vpop.f32.mrb[0].mxu0
  %v1416 = vadd.f32 %v1246, %v1415
  %v1417 = vpop.f32.mrb[0].mxu0
  %1418 = vmatprep.mubr.bf16.mxu0 0
  %1419 = vmatmul.mubr.bf16.gmra.mrb[0].mxu0 %v1355
  %v1420 = vpop.f32.mrb[0].mxu0
  %v1421 = vadd.f32 %v1251, %v1420
  %v1422 = vpop.f32.mrb[0].mxu0
  %v1423 = vpop.f32.mrb[0].mxu0
  %v1424 = vadd.f32 %v1256, %v1423
  %v1425 = vpop.f32.mrb[0].mxu0
  %1426 = vmatprep.mubr.bf16.mxu0 0
  %1427 = vmatmul.mubr.bf16.gmra.mrb[0].mxu0 %v1358
  %v1428 = vpop.f32.mrb[0].mxu0
  %v1429 = vadd.f32 %v1261, %v1428
  %v1430 = vpop.f32.mrb[0].mxu0
  %v1431 = vpop.f32.mrb[0].mxu0
  %v1432 = vadd.f32 %v1266, %v1431
  %v1433 = vpop.f32.mrb[0].mxu0
  %1434 = vmatprep.mubr.bf16.mxu0 0
  %1435 = vmatmul.mubr.bf16.gmra.mrb[0].mxu0 %v1361
  %v1436 = vpop.f32.mrb[0].mxu0
  %v1437 = vadd.f32 %v1271, %v1436
  %v1438 = vpop.f32.mrb[0].mxu0
  %v1439 = vpop.f32.mrb[0].mxu0
  %v1440 = vadd.f32 %v1276, %v1439
  %v1441 = vpop.f32.mrb[0].mxu0
  %1442 = vmatprep.mubr.bf16.mxu0 0
  %1443 = vmatmul.mubr.bf16.gmra.mrb[0].mxu0 %v1364
  %v1444 = vpop.f32.mrb[0].mxu0
  %v1445 = vadd.f32 %v1281, %v1444
  %v1446 = vpop.f32.mrb[0].mxu0
  %v1447 = vpop.f32.mrb[0].mxu0
  %v1448 = vadd.f32 %v1286, %v1447
  %v1449 = vpop.f32.mrb[0].mxu0
  %1450 = vmatprep.mubr.bf16.mxu0 0
  %1451 = vmatmul.mubr.bf16.gmra.mrb[0].mxu0 %v1367
  %v1452 = vpop.f32.mrb[0].mxu0
  %v1453 = vadd.f32 %v1291, %v1452
  %v1454 = vpop.f32.mrb[0].mxu0
  %v1455 = vpop.f32.mrb[0].mxu0
  %v1456 = vadd.f32 %v1296, %v1455
  %v1457 = vpop.f32.mrb[0].mxu0
  %1458 = vmatprep.mubr.bf16.mxu0 0
  %1459 = vmatmul.mubr.bf16.gmra.mrb[0].mxu0 %v1370
  %v1460 = vpop.f32.mrb[0].mxu0
  %v1461 = vadd.f32 %v1301, %v1460
  %v1462 = vpop.f32.mrb[0].mxu0
  %v1463 = vpop.f32.mrb[0].mxu0
  %v1464 = vadd.f32 %v1306, %v1463
  %v1465 = vpop.f32.mrb[0].mxu0
  %1466 = vmatprep.mubr.bf16.mxu0 0
  %1467 = vmatmul.mubr.bf16.gmra.mrb[0].mxu0 %v1373
  %v1468 = vpop.f32.mrb[0].mxu0
  %v1469 = vadd.f32 %v1311, %v1468
  %v1470 = vpop.f32.mrb[0].mxu0
  %v1471 = vpop.f32.mrb[0].mxu0
  %v1472 = vpop.f32.mrb[0].mxu0
  %1473 = vdwg.mxu0
  %v1474 = vmax.f32 %v1413, 0.0
  %v1475 = vmax.f32 %v1416, 0.0
  %v1476 = vmax.f32 %v1421, 0.0
  %v1477 = vmax.f32 %v1424, 0.0
  %v1478 = vmax.f32 %v1429, 0.0
  %v1479 = vmax.f32 %v1432, 0.0
  %v1480 = vmax.f32 %v1437, 0.0
  %v1481 = vmax.f32 %v1440, 0.0
  %v1482 = vmax.f32 %v1445, 0.0
  %v1483 = vmax.f32 %v1448, 0.0
  %v1484 = vmax.f32 %v1453, 0.0
  %v1485 = vmax.f32 %v1456, 0.0
  %v1486 = vmax.f32 %v1461, 0.0
  %v1487 = vmax.f32 %v1464, 0.0
  %v1488 = vmax.f32 %v1469, 0.0
  %v1489 = vpack.c.bf16 %v1475, %v1474
  %v1490 = vpack.c.bf16 %v1477, %v1476
  %v1491 = vpack.c.bf16 %v1479, %v1478
  %v1492 = vpack.c.bf16 %v1481, %v1480
  %v1493 = vpack.c.bf16 %v1483, %v1482
  %v1494 = vpack.c.bf16 %v1485, %v1484
  %v1495 = vpack.c.bf16 %v1487, %v1486
  %v1496 = vpack.c.bf16 %v1488, %v1488
  %v1497 = vld [vmem:[%s5] sm:$0x7]
  %v1498 = vld [vmem:[%s6] sm:$0x3f]
  %1500 = vset.pattern.permute.xlu0 0
  %1501 = vperm.xlu0 %1500, %v1498
  %v1502 = vpop.permute.xlu0 %1501
  %v1505 = vsel %vm476, %v1497, 0
  %v1508 = vsel %vm501, %v1496, 0
  %1510 = vmatprep.subr.bf16.mxu0 0
  %1511 = vmatpush1.bf16.msra.mxu0 %v1489
  %1512 = vmatprep.subr.bf16.mxu0 0
  %1513 = vmatpush1.bf16.msra.mxu0 %v1490
  %1514 = vmatprep.subr.bf16.mxu0 0
  %1515 = vmatpush1.bf16.msra.mxu0 %v1491
  %1516 = vmatprep.subr.bf16.mxu0 0
  %1517 = vmatpush1.bf16.msra.mxu0 %v1492
  %1518 = vmatprep.subr.bf16.mxu0 0
  %1519 = vmatpush1.bf16.msra.mxu0 %v1493
  %1520 = vmatprep.subr.bf16.mxu0 0
  %1521 = vmatpush1.bf16.msra.mxu0 %v1494
  %1522 = vmatprep.subr.bf16.mxu0 0
  %1523 = vmatpush1.bf16.msra.mxu0 %v1495
  %1524 = vmatprep.subr.bf16.mxu0 0
  %1525 = vmatpush1.bf16.msra.mxu0 %v1508
  %1526 = vmatprep.subr.bf16.mxu0 0
  %1527 = vmatpush1.bf16.msra.mxu0 0
  %1528 = vmatprep.subr.bf16.mxu0 0
  %1529 = vmatpush1.bf16.msra.mxu0 0
  %1530 = vmatprep.subr.bf16.mxu0 0
  %1531 = vmatpush1.bf16.msra.mxu0 0
  %1532 = vmatprep.subr.bf16.mxu0 0
  %1533 = vmatpush1.bf16.msra.mxu0 0
  %1534 = vmatprep.subr.bf16.mxu0 0
  %1535 = vmatpush1.bf16.msra.mxu0 0
  %1536 = vmatprep.subr.bf16.mxu0 0
  %1537 = vmatpush1.bf16.msra.mxu0 0
  %1538 = vmatprep.subr.bf16.mxu0 0
  %1539 = vmatpush1.bf16.msra.mxu0 0
  %1540 = vmatprep.subr.bf16.mxu0 0
  %1541 = vmatpush1.bf16.msra.mxu0 0
  %1542 = vmatprep.mubr.bf16.mxu0 0
  %1543 = vmatmul.mubr.bf16.gmra.mrb[0].mxu0 %v1505
  %v1544 = vpop.f32.mrb[0].mxu0
  %v1545 = vadd.f32 %v1502, %v1544
  %v1546 = vpop.f32.mrb[0].mxu0
  %v1547 = vpop.f32.mrb[0].mxu0
  %v1548 = vpop.f32.mrb[0].mxu0
  %1549 = vdwg.mxu0
  %1550 = vst [vmem:[%s7] sm:$0x3f] %v1545
  // Predicated region
  $region30: #{actor_forward.1} parent=0 // pred_check
    _
  $region31: #{actor_forward.1} parent=0 // pred_check_branch
    %1552 = sbr.rel (0) target = $region33
  $region32: #{actor_forward.1} parent=0 // pred_region
    _
  $region33: #{actor_forward.1} parent=0 // pred_fallthru
    _
  // Predicated region
  $region34: #{actor_forward.1} parent=0 // pred_check
    _
  $region35: #{actor_forward.1} parent=0 // pred_check_branch
    %1554 = sbr.rel (0) target = $region37
  $region36: #{actor_forward.1} parent=0 // pred_region
    _
  $region37: #{actor_forward.1} parent=0 // pred_fallthru
    _

</llo_original>
